<compile_context>
chip_gen: v6e
topology: v6e:2x2x1
jax: 0.10.0
libtpu: 0.0.40
codegen_flags: <defaults>
</compile_context>

<pallas_src>
import functools

import jax
import jax.numpy as jnp
from jax.experimental import pallas as pl
from jax.experimental.pallas import tpu as pltpu

VARIANCE = 1.0
LENGTHSCALE = 1.0


def _pick_vmem_limit():
    """Scoped-VMEM budget ~= half of physical (64 MiB v5e/v6e, 32 MiB v7x)."""
    cap = None
    try:
        cap = getattr(pltpu.get_tpu_info(), "vmem_capacity_bytes", None)
    except Exception:
        cap = None
    if not cap:
        cap = 128 * 1024 * 1024
    return int(max(32 * 1024 * 1024, min(cap // 2, 96 * 1024 * 1024)))


# ----------------------------- Pallas kernels ------------------------------

def _rbf_body(a_ref, bt_ref, k_ref, *, variance, inv_2l2, dim):
    # K(a, b) = variance * exp(-||a - b||^2 / (2 * lengthscale^2))
    # a: (Ma, dim) sublane-side points, bt: (dim, tn) lane-side points.
    # Pure VPU + EUP: no dim=2 MXU contraction, no cross-lane reductions.
    a = a_ref[...]
    bt = bt_ref[...]
    sq = (a[:, 0:1] - bt[0:1, :]) ** 2
    for d in range(1, dim):
        sq = sq + (a[:, d:d + 1] - bt[d:d + 1, :]) ** 2
    k_ref[...] = variance * jnp.exp(-inv_2l2 * sq)


def rbf_cov(a, bt, *, tn, vmem_limit, variance=VARIANCE, lengthscale=LENGTHSCALE):
    """K(a, b) with b supplied transposed as (dim, Nb); output (Ma, Nb)."""
    Ma, dim = a.shape
    _, Nb = bt.shape
    assert Nb % tn == 0
    inv_2l2 = 0.5 / (lengthscale * lengthscale)
    return pl.pallas_call(
        functools.partial(_rbf_body, variance=variance, inv_2l2=inv_2l2, dim=dim),
        out_shape=jax.ShapeDtypeStruct((Ma, Nb), jnp.float32),
        grid=(Nb // tn,),
        in_specs=[pl.BlockSpec((Ma, dim), lambda j: (0, 0)),
                  pl.BlockSpec((dim, tn), lambda j: (0, j))],
        out_specs=pl.BlockSpec((Ma, tn), lambda j: (0, j)),
        compiler_params=pltpu.CompilerParams(
            dimension_semantics=("parallel",),
            vmem_limit_bytes=vmem_limit),
    )(a, bt)


def _rbf_solve_body(a_ref, bt_ref, ainv_ref, wt_ref, *, variance, inv_2l2, dim):
    # Fused Kzx tile + cholesky_solve: wt_tile = Kzz^{-1} @ rbf(Z, x_tile).
    # The (M, tn) Kzx tile stays in VMEM and never touches HBM.
    a = a_ref[...]                                              # (M, dim)
    bt = bt_ref[...]                                            # (dim, tn)
    sq = (a[:, 0:1] - bt[0:1, :]) ** 2
    for d in range(1, dim):
        sq = sq + (a[:, d:d + 1] - bt[d:d + 1, :]) ** 2
    k = variance * jnp.exp(-inv_2l2 * sq)                       # (M, tn)
    wt_ref[...] = jnp.dot(ainv_ref[...], k,
                          preferred_element_type=jnp.float32)   # (Mp, tn)


def rbf_solve(z, xt, ainv, *, tn, vmem_limit,
              variance=VARIANCE, lengthscale=LENGTHSCALE):
    """wt = ainv @ rbf(z, x); z (M, dim), xt (dim, Np), ainv (Mp, M) -> (Mp, Np)."""
    M, dim = z.shape
    _, Np = xt.shape
    Mp = ainv.shape[0]
    assert Np % tn == 0 and ainv.shape[1] == M
    inv_2l2 = 0.5 / (lengthscale * lengthscale)
    return pl.pallas_call(
        functools.partial(_rbf_solve_body, variance=variance,
                          inv_2l2=inv_2l2, dim=dim),
        out_shape=jax.ShapeDtypeStruct((Mp, Np), jnp.float32),
        grid=(Np // tn,),
        in_specs=[pl.BlockSpec((M, dim), lambda j: (0, 0)),
                  pl.BlockSpec((dim, tn), lambda j: (0, j)),
                  pl.BlockSpec((Mp, M), lambda j: (0, 0))],
        out_specs=pl.BlockSpec((Mp, tn), lambda j: (0, j)),
        compiler_params=pltpu.CompilerParams(
            dimension_semantics=("parallel",),
            vmem_limit_bytes=vmem_limit),
    )(z, xt, ainv)


def _lower_chol_and_diff_body(lu_raw_ref, kzz_ref, lu_ref, diff_ref):
    # torch transform_to(lower_cholesky): tril(-1) + exp(diag)
    # fused: diff = Lu @ Lu^T - Kzz (un-jittered Kzz, exactly as the reference)
    x = lu_raw_ref[0]                                           # (M, M)
    m = x.shape[0]
    row = jax.lax.broadcasted_iota(jnp.int32, (m, m), 0)
    col = jax.lax.broadcasted_iota(jnp.int32, (m, m), 1)
    is_diag = row == col
    diag_exp = jnp.exp(jnp.where(is_diag, x, 0.0))
    lu = jnp.where(row > col, x, 0.0) + jnp.where(is_diag, diag_exp, 0.0)
    lu_ref[0] = lu
    s = jax.lax.dot_general(lu, lu, (((1,), (1,)), ((), ())),
                            preferred_element_type=jnp.float32)  # Lu @ Lu^T
    diff_ref[0] = s - kzz_ref[...]


def lower_chol_and_diff(lu_raw, kzz, *, vmem_limit):
    L, M, _ = lu_raw.shape
    spec3 = pl.BlockSpec((1, M, M), lambda l: (l, 0, 0))
    # NOTE: the constant-index kzz block could be pipeline_mode=pl.Buffered(1)
    # on v7x to save one (M, M) buffer; left default since M is small for NSF.
    return pl.pallas_call(
        _lower_chol_and_diff_body,
        out_shape=(jax.ShapeDtypeStruct((L, M, M), jnp.float32),
                   jax.ShapeDtypeStruct((L, M, M), jnp.float32)),
        grid=(L,),
        in_specs=[spec3, pl.BlockSpec((M, M), lambda l: (0, 0))],
        out_specs=(spec3, spec3),
        compiler_params=pltpu.CompilerParams(
            dimension_semantics=("parallel",),
            vmem_limit_bytes=vmem_limit),
    )(lu_raw, kzz)


def _mean_std_body(wt_ref, mu_ref, diff2_ref, mean_ref, std_ref,
                   *, variance, n_l, mp):
    # All L latent GPs processed together: wt is read from HBM once per tile.
    wt = wt_ref[...]                                            # (Mp, tn)
    # mean_l = mu_l @ wt : one L-row MXU dot per tile (not one per l).
    mean_ref[...] = jnp.dot(mu_ref[...], wt,
                            preferred_element_type=jnp.float32)  # (L, tn)
    # All L (Mp, Mp) diffs in a single (L*Mp, Mp) @ (Mp, tn) MXU matmul.
    big = jnp.dot(diff2_ref[...], wt,
                  preferred_element_type=jnp.float32)            # (L*Mp, tn)
    rows = []
    for l in range(n_l):                                         # static, 8-aligned slices
        tmp = big[l * mp:(l + 1) * mp, :]                        # (Mp, tn)
        rows.append(variance + jnp.sum(wt * tmp, axis=0, keepdims=True))
    cov = jnp.concatenate(rows, axis=0)                          # (L, tn)
    # clamp so padded / degenerate columns never give std == 0 (inf log-prob)
    std_ref[...] = jnp.sqrt(jnp.maximum(cov, 1e-12))


def predictive_mean_std(wt, mu_p, diff2, *, n_l, tn, vmem_limit,
                        variance=VARIANCE):
    """wt (Mp, Np) == W^T, mu_p (L, Mp), diff2 (L*Mp, Mp) -> mean, std (L, Np)."""
    Mp, Np = wt.shape
    assert Np % tn == 0
    assert mu_p.shape == (n_l, Mp) and diff2.shape == (n_l * Mp, Mp)
    return pl.pallas_call(
        functools.partial(_mean_std_body, variance=variance, n_l=n_l, mp=Mp),
        out_shape=(jax.ShapeDtypeStruct((n_l, Np), jnp.float32),
                   jax.ShapeDtypeStruct((n_l, Np), jnp.float32)),
        grid=(Np // tn,),
        in_specs=[pl.BlockSpec((Mp, tn), lambda j: (0, j)),
                  pl.BlockSpec((n_l, Mp), lambda j: (0, 0)),
                  pl.BlockSpec((n_l * Mp, Mp), lambda j: (0, 0))],
        out_specs=(pl.BlockSpec((n_l, tn), lambda j: (0, j)),
                   pl.BlockSpec((n_l, tn), lambda j: (0, j))),
        compiler_params=pltpu.CompilerParams(
            dimension_semantics=("parallel",),
            vmem_limit_bytes=vmem_limit),
    )(wt, mu_p, diff2)


def _sample_project_body(mean_ref, std_ref, eps_ref, wabs_ref, vabs_ref,
                         rate_ref, f_ref, *, n_e):
    # grid = (Np//tn, Dp//td); D-tile axis innermost so the mean/std/eps/|V|
    # blocks (index depends only on the N tile) are never re-DMA'd, and
    # f = |V| * exp(mean + std * eps) is computed once per N tile and cached
    # in VMEM scratch for every gene tile.
    @pl.when(pl.program_id(1) == 0)
    def _():
        f_ref[...] = vabs_ref[...][None, :, :] * jnp.exp(
            mean_ref[...][None, :, :]
            + std_ref[...][None, :, :] * eps_ref[...])           # (E, L, tn)

    w = wabs_ref[...]                                            # (td, L)
    for e in range(n_e):                                         # E is small; static unroll
        rate_ref[e] = jnp.dot(w, f_ref[e],
                              preferred_element_type=jnp.float32
                              ).astype(rate_ref.dtype)


def sample_and_project(mean, std, eps, w_abs, v_abs, *, td, tn, vmem_limit,
                       out_dtype=jnp.float32):
    """mean/std (L,Np), eps (E,L,Np), |W| (Dp,L), |V| (1,Np) -> (E,Dp,Np)."""
    L, Np = mean.shape
    E = eps.shape[0]
    Dp = w_abs.shape[0]
    assert Np % tn == 0 and Dp % td == 0
    return pl.pallas_call(
        functools.partial(_sample_project_body, n_e=E),
        out_shape=jax.ShapeDtypeStruct((E, Dp, Np), out_dtype),
        grid=(Np // tn, Dp // td),          # N tiles outer, D tiles inner
        in_specs=[pl.BlockSpec((L, tn), lambda j, i: (0, j)),
                  pl.BlockSpec((L, tn), lambda j, i: (0, j)),
                  pl.BlockSpec((E, L, tn), lambda j, i: (0, 0, j)),
                  pl.BlockSpec((td, L), lambda j, i: (i, 0)),
                  pl.BlockSpec((1, tn), lambda j, i: (0, j))],
        out_specs=pl.BlockSpec((E, td, tn), lambda j, i: (0, i, j)),
        scratch_shapes=[pltpu.VMEM((E, L, tn), jnp.float32)],
        compiler_params=pltpu.CompilerParams(
            # the cached-f scratch carries state across the inner D axis
            dimension_semantics=("parallel", "arbitrary"),
            vmem_limit_bytes=vmem_limit),
    )(mean, std, eps, w_abs, v_abs)


# --------------------------- NSF forward (glue) -----------------------------

def _pad_axis(x, axis, mult):
    n = x.shape[axis]
    pad = (-n) % mult
    if pad:
        widths = [(0, 0)] * x.ndim
        widths[axis] = (0, pad)
        x = jnp.pad(x, widths)
    return x


def _round_up(n, mult):
    return ((n + mult - 1) // mult) * mult


def nsf_forward(params, X, eps, jitter=1e-4, n_tile=1024,
                rate_dtype=jnp.float32):
    Z = params["Z"]          # (M, 2)
    lu_raw = params["Lu"]    # (L, M, M)
    mu = params["mu"]        # (L, M)
    Wd = params["W"]         # (D, L)
    V = params["V"]          # (N,)

    N, dim = X.shape
    M = Z.shape[0]
    L = mu.shape[0]
    D = Wd.shape[0]
    E = eps.shape[0]

    vmem_limit = _pick_vmem_limit()

    # Lane tile over the spot axis N (lane-dense everywhere).
    tn = N if N <= n_tile else n_tile

    # Gene-axis tile: keep the double-buffered (E, td, tn) output block within
    # ~half the scoped-VMEM budget (rest: eps block, f scratch, mean/std, |W|).
    out_budget = vmem_limit // 2
    max_td = max(8, out_budget // (2 * E * tn * 4))
    if D <= max_td:
        td = D
    elif max_td >= 128:
        td = (max_td // 128) * 128
    else:
        td = (max_td // 8) * 8

    # Sublane-align M so the batched (L*Mp, Mp) matmul and its per-l slices
    # stay layout-trivial; the zero padding is mathematically inert.
    Mp = _round_up(M, 8)

    Xp = _pad_axis(X, 0, tn)                           # (Np, dim)
    epsp = _pad_axis(eps, 2, tn)                       # (E, L, Np)
    Vp = _pad_axis(V.reshape(1, N), 1, tn)             # (1, Np)
    Wdp = _pad_axis(Wd, 0, td)                         # (Dp, L)

    # --- SVGP (kernel(X, X, diag=True) == VARIANCE, folded into the kernel) ---
    kzz = rbf_cov(Z, Z.T, tn=M, vmem_limit=vmem_limit)               # (M, M)

    # TODO(synk): Cholesky of the tiny (M, M) system has no clean Pallas TPU
    # equivalent and stays in XLA; the (M, N) cholesky_solve itself is done as
    # a Pallas MXU matmul (Kzz^{-1} @ Kzx) fused with the Kzx RBF tile.
    l_chol = jnp.linalg.cholesky(kzz + jitter * jnp.eye(M, dtype=jnp.float32))
    eye_m = jnp.eye(M, dtype=jnp.float32)
    kzz_inv = jax.scipy.linalg.cho_solve((l_chol, True), eye_m)      # (M, M)
    kzz_inv_p = jnp.pad(kzz_inv, ((0, Mp - M), (0, 0)))              # (Mp, M)

    # wt == W^T = Kzz^{-1} Kzx, tile-by-tile, never materializing Kzx in HBM.
    wt = rbf_solve(Z, Xp.T, kzz_inv_p, tn=tn, vmem_limit=vmem_limit)  # (Mp, Np)

    lu, diff = lower_chol_and_diff(lu_raw, kzz,
                                   vmem_limit=vmem_limit)            # (L, M, M)

    diff_p = jnp.pad(diff, ((0, 0), (0, Mp - M), (0, Mp - M)))       # (L, Mp, Mp)
    diff2 = diff_p.reshape(L * Mp, Mp)
    mu_p = jnp.pad(mu, ((0, 0), (0, Mp - M)))                        # (L, Mp)

    mean_p, std_p = predictive_mean_std(wt, mu_p, diff2, n_l=L, tn=tn,
                                        vmem_limit=vmem_limit)       # (L, Np)

    # --- NSF head: F = exp(qF.rsample((E,))); Z = |W| @ F; rate = |V| * Z ---
    rate_p = sample_and_project(mean_p, std_p, epsp,
                                jnp.abs(Wdp), jnp.abs(Vp),
                                td=td, tn=tn, vmem_limit=vmem_limit,
                                out_dtype=rate_dtype)                # (E, Dp, Np)

    rate = rate_p[:, :D, :N]
    mean = mean_p[:, :N]
    std = std_p[:, :N]

    qF = (mean, std)                          # Normal(mean, std) params
    qU = (mu, lu)                             # MVN(mu, scale_tril=Lu) params
    pU = (jnp.zeros_like(mu), l_chol)         # MVN(0, scale_tril=L) params
    return rate, qF, qU, pU


if __name__ == "__main__":
    # Small shapes consistent with NSF: N spots in 2-D space, M inducing
    # points, L latent factors, D genes, E Monte-Carlo samples.
    N, M, L, D, E, DIM = 16, 8, 4, 6, 3, 2

    key = jax.random.PRNGKey(0)
    k_x, k_z, k_lu, k_w, k_eps = jax.random.split(key, 5)

    X = jax.random.normal(k_x, (N, DIM), dtype=jnp.float32)
    params = {
        "Z": jax.random.normal(k_z, (M, DIM), dtype=jnp.float32),      # randn
        "Lu": 0.05 * jax.random.uniform(k_lu, (L, M, M), dtype=jnp.float32),
        "mu": jnp.zeros((L, M), dtype=jnp.float32),
        "W": jax.random.uniform(k_w, (D, L), dtype=jnp.float32),       # rand
        "V": jnp.ones((N,), dtype=jnp.float32),
    }
    eps = jax.random.normal(k_eps, (E, L, N), dtype=jnp.float32)       # rsample noise

    rate, (mean, std), (q_mu, q_lu), (p_mu, p_l) = jax.jit(nsf_forward)(
        params, X, eps)
    jax.block_until_ready(rate)

    assert rate.shape == (E, D, N)
    assert mean.shape == (L, N) and std.shape == (L, N)
    assert q_lu.shape == (L, M, M) and p_l.shape == (M, M)
    assert bool(jnp.all(jnp.isfinite(rate)))
    assert bool(jnp.all(jnp.isfinite(std)))
    print("KERNEL_OK")
</pallas_src>

<mosaic_0001>
module attributes {stable_mosaic.version = 11 : i64} {
  func.func @_rbf_body(%arg0: i32, %arg1: memref<8x2xf32, #tpu.memory_space<vmem>>, %arg2: memref<2x8xf32, #tpu.memory_space<vmem>>, %arg3: memref<8x8xf32, #tpu.memory_space<vmem>>) attributes {dimension_semantics = [#tpu.dimension_semantics<parallel>], iteration_bounds = array<i64: 1>, scalar_prefetch = 0 : i64, scratch_operands = 0 : i64, tpu.core_type = #tpu.core_type<tc>, window_params = [{pipeline_mode = #tpu.pipeline_mode<synchronous>, transform_indices = @transform_0, window_bounds = array<i64: 8, 2>}, {transform_indices = @transform_1, window_bounds = array<i64: 2, 8>}, {transform_indices = @transform_2, window_bounds = array<i64: 8, 8>}]} {
    %c0 = arith.constant 0 : index
    %c0_0 = arith.constant 0 : index
    %0 = vector.load %arg1[%c0, %c0_0] : memref<8x2xf32, #tpu.memory_space<vmem>>, vector<8x2xf32>
    %c0_1 = arith.constant 0 : index
    %c0_2 = arith.constant 0 : index
    %1 = vector.load %arg2[%c0_1, %c0_2] : memref<2x8xf32, #tpu.memory_space<vmem>>, vector<2x8xf32>
    %2 = vector.extract_strided_slice %0 {offsets = [0, 0], sizes = [8, 1], strides = [1, 1]} : vector<8x2xf32> to vector<8x1xf32>
    %3 = vector.extract_strided_slice %1 {offsets = [0, 0], sizes = [1, 8], strides = [1, 1]} : vector<2x8xf32> to vector<1x8xf32>
    %4 = vector.broadcast %2 : vector<8x1xf32> to vector<8x8xf32>
    %5 = vector.broadcast %3 : vector<1x8xf32> to vector<8x8xf32>
    %6 = arith.subf %4, %5 : vector<8x8xf32>
    %7 = arith.mulf %6, %6 : vector<8x8xf32>
    %8 = vector.extract_strided_slice %0 {offsets = [0, 1], sizes = [8, 1], strides = [1, 1]} : vector<8x2xf32> to vector<8x1xf32>
    %9 = vector.extract_strided_slice %1 {offsets = [1, 0], sizes = [1, 8], strides = [1, 1]} : vector<2x8xf32> to vector<1x8xf32>
    %10 = vector.broadcast %8 : vector<8x1xf32> to vector<8x8xf32>
    %11 = vector.broadcast %9 : vector<1x8xf32> to vector<8x8xf32>
    %12 = arith.subf %10, %11 : vector<8x8xf32>
    %13 = arith.mulf %12, %12 : vector<8x8xf32>
    %14 = arith.addf %7, %13 : vector<8x8xf32>
    %cst = arith.constant -5.000000e-01 : f32
    %15 = vector.broadcast %cst : f32 to vector<8x8xf32>
    %16 = arith.mulf %15, %14 : vector<8x8xf32>
    %17 = math.exp %16 : vector<8x8xf32>
    %cst_3 = arith.constant 1.000000e+00 : f32
    %18 = vector.broadcast %cst_3 : f32 to vector<8x8xf32>
    %19 = arith.mulf %18, %17 : vector<8x8xf32>
    %c0_4 = arith.constant 0 : index
    %c0_5 = arith.constant 0 : index
    %20 = vector.load %arg3[%c0_4, %c0_5] : memref<8x8xf32, #tpu.memory_space<vmem>>, vector<8x8xf32>
    tpu.vector_store %arg3[%c0_4, %c0_5], %19 {strides = array<i32>} : memref<8x8xf32, #tpu.memory_space<vmem>>, vector<8x8xf32>,
    return
  }
  func.func @transform_0(%arg0: i32) -> (i32, i32) {
    %c0_i32 = arith.constant 0 : i32
    %c0_i32_0 = arith.constant 0 : i32
    %c0_i32_1 = arith.constant 0 : i32
    return %c0_i32, %c0_i32_0 : i32, i32
  }
  func.func @transform_1(%arg0: i32) -> (i32, i32) {
    %c0_i32 = arith.constant 0 : i32
    %c0_i32_0 = arith.constant 0 : i32
    return %c0_i32, %arg0 : i32, i32
  }
  func.func @transform_2(%arg0: i32) -> (i32, i32) {
    %c0_i32 = arith.constant 0 : i32
    %c0_i32_0 = arith.constant 0 : i32
    return %c0_i32, %arg0 : i32, i32
  }
}

module attributes {stable_mosaic.version = 11 : i64} {
  func.func @_rbf_solve_body(%arg0: i32, %arg1: memref<8x2xf32, #tpu.memory_space<vmem>>, %arg2: memref<2x16xf32, #tpu.memory_space<vmem>>, %arg3: memref<8x8xf32, #tpu.memory_space<vmem>>, %arg4: memref<8x16xf32, #tpu.memory_space<vmem>>) attributes {dimension_semantics = [#tpu.dimension_semantics<parallel>], iteration_bounds = array<i64: 1>, scalar_prefetch = 0 : i64, scratch_operands = 0 : i64, tpu.core_type = #tpu.core_type<tc>, window_params = [{pipeline_mode = #tpu.pipeline_mode<synchronous>, transform_indices = @transform_0, window_bounds = array<i64: 8, 2>}, {transform_indices = @transform_1, window_bounds = array<i64: 2, 16>}, {pipeline_mode = #tpu.pipeline_mode<synchronous>, transform_indices = @transform_2, window_bounds = array<i64: 8, 8>}, {transform_indices = @transform_3, window_bounds = array<i64: 8, 16>}]} {
    %c0 = arith.constant 0 : index
    %c0_0 = arith.constant 0 : index
    %0 = vector.load %arg1[%c0, %c0_0] : memref<8x2xf32, #tpu.memory_space<vmem>>, vector<8x2xf32>
    %c0_1 = arith.constant 0 : index
    %c0_2 = arith.constant 0 : index
    %1 = vector.load %arg2[%c0_1, %c0_2] : memref<2x16xf32, #tpu.memory_space<vmem>>, vector<2x16xf32>
    %2 = vector.extract_strided_slice %0 {offsets = [0, 0], sizes = [8, 1], strides = [1, 1]} : vector<8x2xf32> to vector<8x1xf32>
    %3 = vector.extract_strided_slice %1 {offsets = [0, 0], sizes = [1, 16], strides = [1, 1]} : vector<2x16xf32> to vector<1x16xf32>
    %4 = vector.broadcast %2 : vector<8x1xf32> to vector<8x16xf32>
    %5 = vector.broadcast %3 : vector<1x16xf32> to vector<8x16xf32>
    %6 = arith.subf %4, %5 : vector<8x16xf32>
    %7 = arith.mulf %6, %6 : vector<8x16xf32>
    %8 = vector.extract_strided_slice %0 {offsets = [0, 1], sizes = [8, 1], strides = [1, 1]} : vector<8x2xf32> to vector<8x1xf32>
    %9 = vector.extract_strided_slice %1 {offsets = [1, 0], sizes = [1, 16], strides = [1, 1]} : vector<2x16xf32> to vector<1x16xf32>
    %10 = vector.broadcast %8 : vector<8x1xf32> to vector<8x16xf32>
    %11 = vector.broadcast %9 : vector<1x16xf32> to vector<8x16xf32>
    %12 = arith.subf %10, %11 : vector<8x16xf32>
    %13 = arith.mulf %12, %12 : vector<8x16xf32>
    %14 = arith.addf %7, %13 : vector<8x16xf32>
    %cst = arith.constant -5.000000e-01 : f32
    %15 = vector.broadcast %cst : f32 to vector<8x16xf32>
    %16 = arith.mulf %15, %14 : vector<8x16xf32>
    %17 = math.exp %16 : vector<8x16xf32>
    %cst_3 = arith.constant 1.000000e+00 : f32
    %18 = vector.broadcast %cst_3 : f32 to vector<8x16xf32>
    %19 = arith.mulf %18, %17 : vector<8x16xf32>
    %c0_4 = arith.constant 0 : index
    %c0_5 = arith.constant 0 : index
    %20 = vector.load %arg3[%c0_4, %c0_5] : memref<8x8xf32, #tpu.memory_space<vmem>>, vector<8x8xf32>
    %cst_6 = arith.constant dense<0.000000e+00> : vector<8x16xf32>
    %21 = tpu.matmul %20, %19, %cst_6 {dimension_numbers = #tpu.dot_dimension_numbers<[1], [0], [0], [1], [0, 0, 1, 1], [], []>} : vector<8x8xf32>, vector<8x16xf32>, vector<8x16xf32> -> vector<8x16xf32>
    %c0_7 = arith.constant 0 : index
    %c0_8 = arith.constant 0 : index
    %22 = vector.load %arg4[%c0_7, %c0_8] : memref<8x16xf32, #tpu.memory_space<vmem>>, vector<8x16xf32>
    tpu.vector_store %arg4[%c0_7, %c0_8], %21 {strides = array<i32>} : memref<8x16xf32, #tpu.memory_space<vmem>>, vector<8x16xf32>,
    return
  }
  func.func @transform_0(%arg0: i32) -> (i32, i32) {
    %c0_i32 = arith.constant 0 : i32
    %c0_i32_0 = arith.constant 0 : i32
    %c0_i32_1 = arith.constant 0 : i32
    return %c0_i32, %c0_i32_0 : i32, i32
  }
  func.func @transform_1(%arg0: i32) -> (i32, i32) {
    %c0_i32 = arith.constant 0 : i32
    %c0_i32_0 = arith.constant 0 : i32
    return %c0_i32, %arg0 : i32, i32
  }
  func.func @transform_2(%arg0: i32) -> (i32, i32) {
    %c0_i32 = arith.constant 0 : i32
    %c0_i32_0 = arith.constant 0 : i32
    %c0_i32_1 = arith.constant 0 : i32
    return %c0_i32, %c0_i32_0 : i32, i32
  }
  func.func @transform_3(%arg0: i32) -> (i32, i32) {
    %c0_i32 = arith.constant 0 : i32
    %c0_i32_0 = arith.constant 0 : i32
    return %c0_i32, %arg0 : i32, i32
  }
}

module attributes {stable_mosaic.version = 11 : i64} {
  func.func @_lower_chol_and_diff_body(%arg0: i32, %arg1: memref<1x8x8xf32, #tpu.memory_space<vmem>>, %arg2: memref<8x8xf32, #tpu.memory_space<vmem>>, %arg3: memref<1x8x8xf32, #tpu.memory_space<vmem>>, %arg4: memref<1x8x8xf32, #tpu.memory_space<vmem>>) attributes {dimension_semantics = [#tpu.dimension_semantics<parallel>], iteration_bounds = array<i64: 4>, scalar_prefetch = 0 : i64, scratch_operands = 0 : i64, tpu.core_type = #tpu.core_type<tc>, window_params = [{transform_indices = @transform_0, window_bounds = array<i64: 1, 8, 8>}, {pipeline_mode = #tpu.pipeline_mode<synchronous>, transform_indices = @transform_1, window_bounds = array<i64: 8, 8>}, {transform_indices = @transform_2, window_bounds = array<i64: 1, 8, 8>}, {transform_indices = @transform_3, window_bounds = array<i64: 1, 8, 8>}]} {
    %c0 = arith.constant 0 : index
    %c0_0 = arith.constant 0 : index
    %c0_1 = arith.constant 0 : index
    %0 = vector.load %arg1[%c0, %c0_0, %c0_1] : memref<1x8x8xf32, #tpu.memory_space<vmem>>, vector<1x8x8xf32>
    %1 = vector.shape_cast %0 : vector<1x8x8xf32> to vector<8x8xf32>
    %2 = tpu.iota {dimensions = array<i32: 0>} : vector<8x8xi32>
    %3 = tpu.iota {dimensions = array<i32: 1>} : vector<8x8xi32>
    %4 = arith.cmpi eq, %2, %3 : vector<8x8xi32>
    %cst = arith.constant 0.000000e+00 : f32
    %5 = vector.broadcast %cst : f32 to vector<8x8xf32>
    %6 = arith.select %4, %1, %5 : vector<8x8xi1>, vector<8x8xf32>
    %7 = math.exp %6 : vector<8x8xf32>
    %8 = arith.cmpi sgt, %2, %3 : vector<8x8xi32>
    %cst_2 = arith.constant 0.000000e+00 : f32
    %9 = vector.broadcast %cst_2 : f32 to vector<8x8xf32>
    %10 = arith.select %8, %1, %9 : vector<8x8xi1>, vector<8x8xf32>
    %cst_3 = arith.constant 0.000000e+00 : f32
    %11 = vector.broadcast %cst_3 : f32 to vector<8x8xf32>
    %12 = arith.select %4, %7, %11 : vector<8x8xi1>, vector<8x8xf32>
    %13 = arith.addf %10, %12 : vector<8x8xf32>
    %c0_4 = arith.constant 0 : index
    %c0_5 = arith.constant 0 : index
    %c0_6 = arith.constant 0 : index
    %14 = vector.load %arg3[%c0_4, %c0_5, %c0_6] : memref<1x8x8xf32, #tpu.memory_space<vmem>>, vector<1x8x8xf32>
    %15 = vector.shape_cast %14 : vector<1x8x8xf32> to vector<8x8xf32>
    %16 = vector.shape_cast %13 : vector<8x8xf32> to vector<1x8x8xf32>
    tpu.vector_store %arg3[%c0_4, %c0_5, %c0_6], %16 {strides = array<i32>} : memref<1x8x8xf32, #tpu.memory_space<vmem>>, vector<1x8x8xf32>,
    %cst_7 = arith.constant dense<0.000000e+00> : vector<8x8xf32>
    %17 = tpu.matmul %13, %13, %cst_7 {dimension_numbers = #tpu.dot_dimension_numbers<[1], [1], [0], [0], [0, 0, 1, 0], [], []>} : vector<8x8xf32>, vector<8x8xf32>, vector<8x8xf32> -> vector<8x8xf32>
    %c0_8 = arith.constant 0 : index
    %c0_9 = arith.constant 0 : index
    %18 = vector.load %arg2[%c0_8, %c0_9] : memref<8x8xf32, #tpu.memory_space<vmem>>, vector<8x8xf32>
    %19 = arith.subf %17, %18 : vector<8x8xf32>
    %c0_10 = arith.constant 0 : index
    %c0_11 = arith.constant 0 : index
    %c0_12 = arith.constant 0 : index
    %20 = vector.load %arg4[%c0_10, %c0_11, %c0_12] : memref<1x8x8xf32, #tpu.memory_space<vmem>>, vector<1x8x8xf32>
    %21 = vector.shape_cast %20 : vector<1x8x8xf32> to vector<8x8xf32>
    %22 = vector.shape_cast %19 : vector<8x8xf32> to vector<1x8x8xf32>
    tpu.vector_store %arg4[%c0_10, %c0_11, %c0_12], %22 {strides = array<i32>} : memref<1x8x8xf32, #tpu.memory_space<vmem>>, vector<1x8x8xf32>,
    return
  }
  func.func @transform_0(%arg0: i32) -> (i32, i32, i32) {
    %c0_i32 = arith.constant 0 : i32
    %c0_i32_0 = arith.constant 0 : i32
    %c0_i32_1 = arith.constant 0 : i32
    return %arg0, %c0_i32, %c0_i32_0 : i32, i32, i32
  }
  func.func @transform_1(%arg0: i32) -> (i32, i32) {
    %c0_i32 = arith.constant 0 : i32
    %c0_i32_0 = arith.constant 0 : i32
    %c0_i32_1 = arith.constant 0 : i32
    return %c0_i32, %c0_i32_0 : i32, i32
  }
  func.func @transform_2(%arg0: i32) -> (i32, i32, i32) {
    %c0_i32 = arith.constant 0 : i32
    %c0_i32_0 = arith.constant 0 : i32
    %c0_i32_1 = arith.constant 0 : i32
    return %arg0, %c0_i32, %c0_i32_0 : i32, i32, i32
  }
  func.func @transform_3(%arg0: i32) -> (i32, i32, i32) {
    %c0_i32 = arith.constant 0 : i32
    %c0_i32_0 = arith.constant 0 : i32
    %c0_i32_1 = arith.constant 0 : i32
    return %arg0, %c0_i32, %c0_i32_0 : i32, i32, i32
  }
}

module attributes {stable_mosaic.version = 11 : i64} {
  func.func @_mean_std_body(%arg0: i32, %arg1: memref<8x16xf32, #tpu.memory_space<vmem>>, %arg2: memref<4x8xf32, #tpu.memory_space<vmem>>, %arg3: memref<32x8xf32, #tpu.memory_space<vmem>>, %arg4: memref<4x16xf32, #tpu.memory_space<vmem>>, %arg5: memref<4x16xf32, #tpu.memory_space<vmem>>) attributes {dimension_semantics = [#tpu.dimension_semantics<parallel>], iteration_bounds = array<i64: 1>, scalar_prefetch = 0 : i64, scratch_operands = 0 : i64, tpu.core_type = #tpu.core_type<tc>, window_params = [{transform_indices = @transform_0, window_bounds = array<i64: 8, 16>}, {pipeline_mode = #tpu.pipeline_mode<synchronous>, transform_indices = @transform_1, window_bounds = array<i64: 4, 8>}, {pipeline_mode = #tpu.pipeline_mode<synchronous>, transform_indices = @transform_2, window_bounds = array<i64: 32, 8>}, {transform_indices = @transform_3, window_bounds = array<i64: 4, 16>}, {transform_indices = @transform_4, window_bounds = array<i64: 4, 16>}]} {
    %c0 = arith.constant 0 : index
    %c0_0 = arith.constant 0 : index
    %0 = vector.load %arg1[%c0, %c0_0] : memref<8x16xf32, #tpu.memory_space<vmem>>, vector<8x16xf32>
    %c0_1 = arith.constant 0 : index
    %c0_2 = arith.constant 0 : index
    %1 = vector.load %arg2[%c0_1, %c0_2] : memref<4x8xf32, #tpu.memory_space<vmem>>, vector<4x8xf32>
    %cst = arith.constant dense<0.000000e+00> : vector<4x16xf32>
    %2 = tpu.matmul %1, %0, %cst {dimension_numbers = #tpu.dot_dimension_numbers<[1], [0], [0], [1], [0, 0, 1, 1], [], []>} : vector<4x8xf32>, vector<8x16xf32>, vector<4x16xf32> -> vector<4x16xf32>
    %c0_3 = arith.constant 0 : index
    %c0_4 = arith.constant 0 : index
    %3 = vector.load %arg4[%c0_3, %c0_4] : memref<4x16xf32, #tpu.memory_space<vmem>>, vector<4x16xf32>
    tpu.vector_store %arg4[%c0_3, %c0_4], %2 {strides = array<i32>} : memref<4x16xf32, #tpu.memory_space<vmem>>, vector<4x16xf32>,
    %c0_5 = arith.constant 0 : index
    %c0_6 = arith.constant 0 : index
    %4 = vector.load %arg3[%c0_5, %c0_6] : memref<32x8xf32, #tpu.memory_space<vmem>>, vector<32x8xf32>
    %cst_7 = arith.constant dense<0.000000e+00> : vector<32x16xf32>
    %5 = tpu.matmul %4, %0, %cst_7 {dimension_numbers = #tpu.dot_dimension_numbers<[1], [0], [0], [1], [0, 0, 1, 1], [], []>} : vector<32x8xf32>, vector<8x16xf32>, vector<32x16xf32> -> vector<32x16xf32>
    %6 = vector.extract_strided_slice %5 {offsets = [0, 0], sizes = [8, 16], strides = [1, 1]} : vector<32x16xf32> to vector<8x16xf32>
    %7 = arith.mulf %0, %6 : vector<8x16xf32>
    %cst_8 = arith.constant dense<0.000000e+00> : vector<16xf32>
    %8 = vector.multi_reduction <add>, %7, %cst_8 [0] : vector<8x16xf32> to vector<16xf32>
    %9 = vector.shape_cast %8 : vector<16xf32> to vector<1x16xf32>
    %cst_9 = arith.constant 1.000000e+00 : f32
    %10 = vector.broadcast %cst_9 : f32 to vector<1x16xf32>
    %11 = arith.addf %10, %9 : vector<1x16xf32>
    %12 = vector.extract_strided_slice %5 {offsets = [8, 0], sizes = [8, 16], strides = [1, 1]} : vector<32x16xf32> to vector<8x16xf32>
    %13 = arith.mulf %0, %12 : vector<8x16xf32>
    %cst_10 = arith.constant dense<0.000000e+00> : vector<16xf32>
    %14 = vector.multi_reduction <add>, %13, %cst_10 [0] : vector<8x16xf32> to vector<16xf32>
    %15 = vector.shape_cast %14 : vector<16xf32> to vector<1x16xf32>
    %cst_11 = arith.constant 1.000000e+00 : f32
    %16 = vector.broadcast %cst_11 : f32 to vector<1x16xf32>
    %17 = arith.addf %16, %15 : vector<1x16xf32>
    %18 = vector.extract_strided_slice %5 {offsets = [16, 0], sizes = [8, 16], strides = [1, 1]} : vector<32x16xf32> to vector<8x16xf32>
    %19 = arith.mulf %0, %18 : vector<8x16xf32>
    %cst_12 = arith.constant dense<0.000000e+00> : vector<16xf32>
    %20 = vector.multi_reduction <add>, %19, %cst_12 [0] : vector<8x16xf32> to vector<16xf32>
    %21 = vector.shape_cast %20 : vector<16xf32> to vector<1x16xf32>
    %cst_13 = arith.constant 1.000000e+00 : f32
    %22 = vector.broadcast %cst_13 : f32 to vector<1x16xf32>
    %23 = arith.addf %22, %21 : vector<1x16xf32>
    %24 = vector.extract_strided_slice %5 {offsets = [24, 0], sizes = [8, 16], strides = [1, 1]} : vector<32x16xf32> to vector<8x16xf32>
    %25 = arith.mulf %0, %24 : vector<8x16xf32>
    %cst_14 = arith.constant dense<0.000000e+00> : vector<16xf32>
    %26 = vector.multi_reduction <add>, %25, %cst_14 [0] : vector<8x16xf32> to vector<16xf32>
    %27 = vector.shape_cast %26 : vector<16xf32> to vector<1x16xf32>
    %cst_15 = arith.constant 1.000000e+00 : f32
    %28 = vector.broadcast %cst_15 : f32 to vector<1x16xf32>
    %29 = arith.addf %28, %27 : vector<1x16xf32>
    %30 = tpu.concatenate %11, %17, %23, %29 in 0 : vector<1x16xf32>, vector<1x16xf32>, vector<1x16xf32>, vector<1x16xf32> -> vector<4x16xf32>
    %cst_16 = arith.constant 9.99999996E-13 : f32
    %31 = vector.broadcast %cst_16 : f32 to vector<4x16xf32>
    %32 = arith.maximumf %30, %31 : vector<4x16xf32>
    %33 = math.sqrt %32 : vector<4x16xf32>
    %c0_17 = arith.constant 0 : index
    %c0_18 = arith.constant 0 : index
    %34 = vector.load %arg5[%c0_17, %c0_18] : memref<4x16xf32, #tpu.memory_space<vmem>>, vector<4x16xf32>
    tpu.vector_store %arg5[%c0_17, %c0_18], %33 {strides = array<i32>} : memref<4x16xf32, #tpu.memory_space<vmem>>, vector<4x16xf32>,
    return
  }
  func.func @transform_0(%arg0: i32) -> (i32, i32) {
    %c0_i32 = arith.constant 0 : i32
    %c0_i32_0 = arith.constant 0 : i32
    return %c0_i32, %arg0 : i32, i32
  }
  func.func @transform_1(%arg0: i32) -> (i32, i32) {
    %c0_i32 = arith.constant 0 : i32
    %c0_i32_0 = arith.constant 0 : i32
    %c0_i32_1 = arith.constant 0 : i32
    return %c0_i32, %c0_i32_0 : i32, i32
  }
  func.func @transform_2(%arg0: i32) -> (i32, i32) {
    %c0_i32 = arith.constant 0 : i32
    %c0_i32_0 = arith.constant 0 : i32
    %c0_i32_1 = arith.constant 0 : i32
    return %c0_i32, %c0_i32_0 : i32, i32
  }
  func.func @transform_3(%arg0: i32) -> (i32, i32) {
    %c0_i32 = arith.constant 0 : i32
    %c0_i32_0 = arith.constant 0 : i32
    return %c0_i32, %arg0 : i32, i32
  }
  func.func @transform_4(%arg0: i32) -> (i32, i32) {
    %c0_i32 = arith.constant 0 : i32
    %c0_i32_0 = arith.constant 0 : i32
    return %c0_i32, %arg0 : i32, i32
  }
}

module attributes {stable_mosaic.version = 11 : i64} {
  func.func @_sample_project_body(%arg0: i32, %arg1: i32, %arg2: memref<4x16xf32, #tpu.memory_space<vmem>>, %arg3: memref<4x16xf32, #tpu.memory_space<vmem>>, %arg4: memref<3x4x16xf32, #tpu.memory_space<vmem>>, %arg5: memref<6x4xf32, #tpu.memory_space<vmem>>, %arg6: memref<1x16xf32, #tpu.memory_space<vmem>>, %arg7: memref<3x6x16xf32, #tpu.memory_space<vmem>>, %arg8: memref<3x4x16xf32, #tpu.memory_space<vmem>>) attributes {dimension_semantics = [#tpu.dimension_semantics<parallel>, #tpu.dimension_semantics<arbitrary>], iteration_bounds = array<i64: 1, 1>, scalar_prefetch = 0 : i64, scratch_operands = 1 : i64, tpu.core_type = #tpu.core_type<tc>, window_params = [{transform_indices = @transform_0, window_bounds = array<i64: 4, 16>}, {transform_indices = @transform_1, window_bounds = array<i64: 4, 16>}, {transform_indices = @transform_2, window_bounds = array<i64: 3, 4, 16>}, {transform_indices = @transform_3, window_bounds = array<i64: 6, 4>}, {transform_indices = @transform_4, window_bounds = array<i64: 1, 16>}, {transform_indices = @transform_5, window_bounds = array<i64: 3, 6, 16>}]} {
    %c0_i32 = arith.constant 0 : i32
    %0 = arith.cmpi eq, %arg1, %c0_i32 : i32
    %1 = arith.extui %0 : i1 to i32
    %c0_i32_0 = arith.constant 0 : i32
    %2 = arith.cmpi ne, %1, %c0_i32_0 : i32
    scf.if %2 {
      %c0_20 = arith.constant 0 : index
      %c0_21 = arith.constant 0 : index
      %22 = vector.load %arg6[%c0_20, %c0_21] : memref<1x16xf32, #tpu.memory_space<vmem>>, vector<1x16xf32>
      %23 = vector.shape_cast %22 : vector<1x16xf32> to vector<1x1x16xf32>
      %c0_22 = arith.constant 0 : index
      %c0_23 = arith.constant 0 : index
      %24 = vector.load %arg2[%c0_22, %c0_23] : memref<4x16xf32, #tpu.memory_space<vmem>>, vector<4x16xf32>
      %25 = vector.shape_cast %24 : vector<4x16xf32> to vector<1x4x16xf32>
      %c0_24 = arith.constant 0 : index
      %c0_25 = arith.constant 0 : index
      %26 = vector.load %arg3[%c0_24, %c0_25] : memref<4x16xf32, #tpu.memory_space<vmem>>, vector<4x16xf32>
      %27 = vector.shape_cast %26 : vector<4x16xf32> to vector<1x4x16xf32>
      %c0_26 = arith.constant 0 : index
      %c0_27 = arith.constant 0 : index
      %c0_28 = arith.constant 0 : index
      %28 = vector.load %arg4[%c0_26, %c0_27, %c0_28] : memref<3x4x16xf32, #tpu.memory_space<vmem>>, vector<3x4x16xf32>
      %29 = vector.broadcast %27 : vector<1x4x16xf32> to vector<3x4x16xf32>
      %30 = arith.mulf %29, %28 : vector<3x4x16xf32>
      %31 = vector.broadcast %25 : vector<1x4x16xf32> to vector<3x4x16xf32>
      %32 = arith.addf %31, %30 : vector<3x4x16xf32>
      %33 = math.exp %32 : vector<3x4x16xf32>
      %34 = vector.broadcast %23 : vector<1x1x16xf32> to vector<3x4x16xf32>
      %35 = arith.mulf %34, %33 : vector<3x4x16xf32>
      %c0_29 = arith.constant 0 : index
      %c0_30 = arith.constant 0 : index
      %c0_31 = arith.constant 0 : index
      %36 = vector.load %arg8[%c0_29, %c0_30, %c0_31] : memref<3x4x16xf32, #tpu.memory_space<vmem>>, vector<3x4x16xf32>
      tpu.vector_store %arg8[%c0_29, %c0_30, %c0_31], %35 {strides = array<i32>} : memref<3x4x16xf32, #tpu.memory_space<vmem>>, vector<3x4x16xf32>,
    } else {
    }
    %c0 = arith.constant 0 : index
    %c0_1 = arith.constant 0 : index
    %3 = vector.load %arg5[%c0, %c0_1] : memref<6x4xf32, #tpu.memory_space<vmem>>, vector<6x4xf32>
    %c0_2 = arith.constant 0 : index
    %c0_3 = arith.constant 0 : index
    %c0_4 = arith.constant 0 : index
    %4 = vector.load %arg8[%c0_2, %c0_3, %c0_4] : memref<3x4x16xf32, #tpu.memory_space<vmem>>, vector<1x4x16xf32>
    %5 = vector.shape_cast %4 : vector<1x4x16xf32> to vector<4x16xf32>
    %cst = arith.constant dense<0.000000e+00> : vector<6x16xf32>
    %6 = tpu.matmul %3, %5, %cst {dimension_numbers = #tpu.dot_dimension_numbers<[1], [0], [0], [1], [0, 0, 1, 1], [], []>} : vector<6x4xf32>, vector<4x16xf32>, vector<6x16xf32> -> vector<6x16xf32>
    %c0_5 = arith.constant 0 : index
    %c0_6 = arith.constant 0 : index
    %c0_7 = arith.constant 0 : index
    %7 = vector.load %arg7[%c0_5, %c0_6, %c0_7] : memref<3x6x16xf32, #tpu.memory_space<vmem>>, vector<1x6x16xf32>
    %8 = vector.shape_cast %7 : vector<1x6x16xf32> to vector<6x16xf32>
    %9 = vector.shape_cast %6 : vector<6x16xf32> to vector<1x6x16xf32>
    tpu.vector_store %arg7[%c0_5, %c0_6, %c0_7], %9 {strides = array<i32>} : memref<3x6x16xf32, #tpu.memory_space<vmem>>, vector<1x6x16xf32>,
    %c1 = arith.constant 1 : index
    %c0_8 = arith.constant 0 : index
    %c0_9 = arith.constant 0 : index
    %10 = vector.load %arg8[%c1, %c0_8, %c0_9] : memref<3x4x16xf32, #tpu.memory_space<vmem>>, vector<1x4x16xf32>
    %11 = vector.shape_cast %10 : vector<1x4x16xf32> to vector<4x16xf32>
    %cst_10 = arith.constant dense<0.000000e+00> : vector<6x16xf32>
    %12 = tpu.matmul %3, %11, %cst_10 {dimension_numbers = #tpu.dot_dimension_numbers<[1], [0], [0], [1], [0, 0, 1, 1], [], []>} : vector<6x4xf32>, vector<4x16xf32>, vector<6x16xf32> -> vector<6x16xf32>
    %c1_11 = arith.constant 1 : index
    %c0_12 = arith.constant 0 : index
    %c0_13 = arith.constant 0 : index
    %13 = vector.load %arg7[%c1_11, %c0_12, %c0_13] : memref<3x6x16xf32, #tpu.memory_space<vmem>>, vector<1x6x16xf32>
    %14 = vector.shape_cast %13 : vector<1x6x16xf32> to vector<6x16xf32>
    %15 = vector.shape_cast %12 : vector<6x16xf32> to vector<1x6x16xf32>
    tpu.vector_store %arg7[%c1_11, %c0_12, %c0_13], %15 {strides = array<i32>} : memref<3x6x16xf32, #tpu.memory_space<vmem>>, vector<1x6x16xf32>,
    %c2 = arith.constant 2 : index
    %c0_14 = arith.constant 0 : index
    %c0_15 = arith.constant 0 : index
    %16 = vector.load %arg8[%c2, %c0_14, %c0_15] : memref<3x4x16xf32, #tpu.memory_space<vmem>>, vector<1x4x16xf32>
    %17 = vector.shape_cast %16 : vector<1x4x16xf32> to vector<4x16xf32>
    %cst_16 = arith.constant dense<0.000000e+00> : vector<6x16xf32>
    %18 = tpu.matmul %3, %17, %cst_16 {dimension_numbers = #tpu.dot_dimension_numbers<[1], [0], [0], [1], [0, 0, 1, 1], [], []>} : vector<6x4xf32>, vector<4x16xf32>, vector<6x16xf32> -> vector<6x16xf32>
    %c2_17 = arith.constant 2 : index
    %c0_18 = arith.constant 0 : index
    %c0_19 = arith.constant 0 : index
    %19 = vector.load %arg7[%c2_17, %c0_18, %c0_19] : memref<3x6x16xf32, #tpu.memory_space<vmem>>, vector<1x6x16xf32>
    %20 = vector.shape_cast %19 : vector<1x6x16xf32> to vector<6x16xf32>
    %21 = vector.shape_cast %18 : vector<6x16xf32> to vector<1x6x16xf32>
    tpu.vector_store %arg7[%c2_17, %c0_18, %c0_19], %21 {strides = array<i32>} : memref<3x6x16xf32, #tpu.memory_space<vmem>>, vector<1x6x16xf32>,
    return
  }
  func.func @transform_0(%arg0: i32, %arg1: i32) -> (i32, i32) {
    %c0_i32 = arith.constant 0 : i32
    %c0_i32_0 = arith.constant 0 : i32
    return %c0_i32, %arg0 : i32, i32
  }
  func.func @transform_1(%arg0: i32, %arg1: i32) -> (i32, i32) {
    %c0_i32 = arith.constant 0 : i32
    %c0_i32_0 = arith.constant 0 : i32
    return %c0_i32, %arg0 : i32, i32
  }
  func.func @transform_2(%arg0: i32, %arg1: i32) -> (i32, i32, i32) {
    %c0_i32 = arith.constant 0 : i32
    %c0_i32_0 = arith.constant 0 : i32
    %c0_i32_1 = arith.constant 0 : i32
    return %c0_i32, %c0_i32_0, %arg0 : i32, i32, i32
  }
  func.func @transform_3(%arg0: i32, %arg1: i32) -> (i32, i32) {
    %c0_i32 = arith.constant 0 : i32
    %c0_i32_0 = arith.constant 0 : i32
    return %arg1, %c0_i32 : i32, i32
  }
  func.func @transform_4(%arg0: i32, %arg1: i32) -> (i32, i32) {
    %c0_i32 = arith.constant 0 : i32
    %c0_i32_0 = arith.constant 0 : i32
    return %c0_i32, %arg0 : i32, i32
  }
  func.func @transform_5(%arg0: i32, %arg1: i32) -> (i32, i32, i32) {
    %c0_i32 = arith.constant 0 : i32
    %c0_i32_0 = arith.constant 0 : i32
    return %c0_i32, %arg1, %arg0 : i32, i32, i32
  }
}

</mosaic_0001>

<llo_original>
// kernel: custom-call.6
$region0: #{custom-call.6}
  %s0 = inlined_call_operand.vmem [shape: f32[8,8], index: 0, kind: input, shape index: {}]
  %s1 = inlined_call_operand.vmem [shape: f32[8,8], index: 1, kind: output, shape index: {}]
  $region1: #{custom-call.6} parent=0
    #allocation0 [shape = 'u8[4096]{0}', space=vmem, size = 0x1000, scoped, tag = 'operand span for operand 0']
    #allocation1 [shape = 'u8[4096]{0}', space=vmem, size = 0x1000, scoped, tag = 'operand span for operand 1']
    // Predicated region
    $region2: #{custom-call.6} parent=1 // pred_check
      _
    $region3: #{custom-call.6} parent=1 // pred_check_branch
      %3 = sbr.rel (0) target = $region5
    $region4: #{custom-call.6} parent=1 // pred_region
      // Predicated region
      $region6: #{custom-call.6} parent=4 // pred_check
        _
      $region7: #{custom-call.6} parent=4 // pred_check_branch
        %5 = sbr.rel (0) target = $region9
      $region8: #{custom-call.6} parent=4 // pred_region
        // Predicated region
        $region21: #{custom-call.6} parent=8 // pred_check
          _
        $region22: #{custom-call.6} parent=8 // pred_check_branch
          %21 = sbr.rel (0) target = $region24
        $region23: #{custom-call.6} parent=8 // pred_region
          loop: start=0, step=1, limit=1
          $region25: #{custom-call.6} parent=23 // loop_pre_header
            _
          $region26: #{custom-call.6} parent=23 // loop_header
            %s23 = sphi 0, %s27
            %p24 = scmp.ge.s32.totalorder %s23, 1
            %s28 = sphi %s0, %s0
            %s29 = sphi [#allocation0], [#allocation0]
          $region27: #{custom-call.6} parent=23 // loop_header_branch
            %26 = sbr.rel (%p24) target = $region31
          $region28: #{custom-call.6} parent=23 // loop_body
            %v30 = vld [vmem:[%s28] sm:$0xff]
            %31 = vst [vmem:[%s29] sm:$0xff] %v30
          $region29: #{custom-call.6} parent=23 // loop_footer
            %s27 = sadd.s32 1, %s23
          $region30: #{custom-call.6} parent=23 // loop_footer_branch
            %22 = sbr.rel target = $region26
          $region31: #{custom-call.6} parent=23 // loop_exit
            _
        $region24: #{custom-call.6} parent=8 // pred_fallthru
          _
        // Predicated region
        $region32: #{custom-call.6} parent=8 // pred_check
          _
        $region33: #{custom-call.6} parent=8 // pred_check_branch
          %33 = sbr.rel target = $region35
        $region34: #{custom-call.6} parent=8 // pred_region
          _
        $region35: #{custom-call.6} parent=8 // pred_fallthru
          _
      $region9: #{custom-call.6} parent=4 // pred_fallthru
        _
      // Predicated region
      $region10: #{custom-call.6} parent=4 // pred_check
        _
      $region11: #{custom-call.6} parent=4 // pred_check_branch
        %7 = sbr.rel target = $region13
      $region12: #{custom-call.6} parent=4 // pred_region
        %s9 = ssub.s32 256, 1
        loop: start=0, step=1, limit=1
        $region14: #{custom-call.6} parent=12 // loop_pre_header
          _
        $region15: #{custom-call.6} parent=12 // loop_header
          %s11 = sphi 0, %s15
          %p12 = scmp.ge.s32.totalorder %s11, 1
          %s16 = sphi %s0, %s0
          %s17 = sphi [#allocation0], [#allocation0]
        $region16: #{custom-call.6} parent=12 // loop_header_branch
          %14 = sbr.rel (%p12) target = $region20
        $region17: #{custom-call.6} parent=12 // loop_body
          %v18 = vld [vmem:[%s16] sm:%s9]
          %19 = vst [vmem:[%s17] sm:%s9] %v18
        $region18: #{custom-call.6} parent=12 // loop_footer
          %s15 = sadd.s32 1, %s11
        $region19: #{custom-call.6} parent=12 // loop_footer_branch
          %10 = sbr.rel target = $region15
        $region20: #{custom-call.6} parent=12 // loop_exit
          _
      $region13: #{custom-call.6} parent=4 // pred_fallthru
        _
    $region5: #{custom-call.6} parent=1 // pred_fallthru
      _
    %34 = vnop
    %35 = vst [vmem:[#allocation1] sm:$0xff] 0.0
    %vm36 = vcmask 7168
    %v37 = vld [vmem:[#allocation1] ss:$0 sm:$0xff]
    %v38 = vld [vmem:[#allocation0] ss:$0 sm:$0xff]
    %v39 = vmul.f32 %v37, %v37
    %40 = vadd.xlane.f32.xlu0 %v39
    %v41 = vpop.xlane.xlu0 %40
    %v42 = vsub.f32 %v38, %v41
    %v43 = vrsqrt.pop %v42
    %v44 = vld [vmem:[#allocation0] sm:$0xff]
    %v45 = vld [vmem:[#allocation1] sm:$0xff]
    %v46 = vmul.f32 %v45, %v37
    %47 = vadd.xlane.f32.xlu0 %v46
    %v48 = vpop.xlane.xlu0 %47
    %v49 = vsub.f32 %v44, %v48
    %v50 = vmul.f32 %v49, %v43
    %v51 = vsel %vm36, %v50, 0.0
    %v52 = vadd.f32 %v45, %v51
    %53 = vst [vmem:[#allocation1] sm:$0xff] %v52
    %vm54 = vcmask 15368
    %s55 = scalar_lea.vmem [#allocation1], 1
    %v56 = vld [vmem:[%s55] ss:$0 sm:$0xff]
    %s57 = scalar_lea.vmem [#allocation0], 1
    %v58 = vld [vmem:[%s57] ss:$0 sm:$0xff]
    %v59 = vmul.f32 %v56, %v56
    %60 = vadd.xlane.f32.xlu0 %v59
    %v61 = vpop.xlane.xlu0 %60
    %v62 = vsub.f32 %v58, %v61
    %v63 = vrsqrt.pop %v62
    %v64 = vld [vmem:[#allocation0] sm:$0xff]
    %v65 = vld [vmem:[#allocation1] sm:$0xff]
    %v66 = vmul.f32 %v65, %v56
    %67 = vadd.xlane.f32.xlu0 %v66
    %v68 = vpop.xlane.xlu0 %67
    %v69 = vsub.f32 %v64, %v68
    %v70 = vmul.f32 %v69, %v63
    %vm71 = vcmask 1047553
    %vm72 = vmand %vm54, %vm71
    %v73 = vsel %vm72, %v70, 0.0
    %v74 = vadd.f32 %v65, %v73
    %75 = vst [vmem:[#allocation1] sm:$0xff] %v74
    %vm76 = vcmask 23568
    %s77 = scalar_lea.vmem [#allocation1], 2
    %v78 = vld [vmem:[%s77] ss:$0 sm:$0xff]
    %s79 = scalar_lea.vmem [#allocation0], 2
    %v80 = vld [vmem:[%s79] ss:$0 sm:$0xff]
    %v81 = vmul.f32 %v78, %v78
    %82 = vadd.xlane.f32.xlu0 %v81
    %v83 = vpop.xlane.xlu0 %82
    %v84 = vsub.f32 %v80, %v83
    %v85 = vrsqrt.pop %v84
    %v86 = vld [vmem:[#allocation0] sm:$0xff]
    %v87 = vld [vmem:[#allocation1] sm:$0xff]
    %v88 = vmul.f32 %v87, %v78
    %89 = vadd.xlane.f32.xlu0 %v88
    %v90 = vpop.xlane.xlu0 %89
    %v91 = vsub.f32 %v86, %v90
    %v92 = vmul.f32 %v91, %v85
    %vm93 = vcmask 1047554
    %vm94 = vmand %vm76, %vm93
    %v95 = vsel %vm94, %v92, 0.0
    %v96 = vadd.f32 %v87, %v95
    %97 = vst [vmem:[#allocation1] sm:$0xff] %v96
    %vm98 = vcmask 31768
    %s99 = scalar_lea.vmem [#allocation1], 3
    %v100 = vld [vmem:[%s99] ss:$0 sm:$0xff]
    %s101 = scalar_lea.vmem [#allocation0], 3
    %v102 = vld [vmem:[%s101] ss:$0 sm:$0xff]
    %v103 = vmul.f32 %v100, %v100
    %104 = vadd.xlane.f32.xlu0 %v103
    %v105 = vpop.xlane.xlu0 %104
    %v106 = vsub.f32 %v102, %v105
    %v107 = vrsqrt.pop %v106
    %v108 = vld [vmem:[#allocation0] sm:$0xff]
    %v109 = vld [vmem:[#allocation1] sm:$0xff]
    %v110 = vmul.f32 %v109, %v100
    %111 = vadd.xlane.f32.xlu0 %v110
    %v112 = vpop.xlane.xlu0 %111
    %v113 = vsub.f32 %v108, %v112
    %v114 = vmul.f32 %v113, %v107
    %vm115 = vcmask 1047555
    %vm116 = vmand %vm98, %vm115
    %v117 = vsel %vm116, %v114, 0.0
    %v118 = vadd.f32 %v109, %v117
    %119 = vst [vmem:[#allocation1] sm:$0xff] %v118
    %vm120 = vcmask 39968
    %s121 = scalar_lea.vmem [#allocation1], 4
    %v122 = vld [vmem:[%s121] ss:$0 sm:$0xff]
    %s123 = scalar_lea.vmem [#allocation0], 4
    %v124 = vld [vmem:[%s123] ss:$0 sm:$0xff]
    %v125 = vmul.f32 %v122, %v122
    %126 = vadd.xlane.f32.xlu0 %v125
    %v127 = vpop.xlane.xlu0 %126
    %v128 = vsub.f32 %v124, %v127
    %v129 = vrsqrt.pop %v128
    %v130 = vld [vmem:[#allocation0] sm:$0xff]
    %v131 = vld [vmem:[#allocation1] sm:$0xff]
    %v132 = vmul.f32 %v131, %v122
    %133 = vadd.xlane.f32.xlu0 %v132
    %v134 = vpop.xlane.xlu0 %133
    %v135 = vsub.f32 %v130, %v134
    %v136 = vmul.f32 %v135, %v129
    %vm137 = vcmask 1047556
    %vm138 = vmand %vm120, %vm137
    %v139 = vsel %vm138, %v136, 0.0
    %v140 = vadd.f32 %v131, %v139
    %141 = vst [vmem:[#allocation1] sm:$0xff] %v140
    %vm142 = vcmask 48168
    %s143 = scalar_lea.vmem [#allocation1], 5
    %v144 = vld [vmem:[%s143] ss:$0 sm:$0xff]
    %s145 = scalar_lea.vmem [#allocation0], 5
    %v146 = vld [vmem:[%s145] ss:$0 sm:$0xff]
    %v147 = vmul.f32 %v144, %v144
    %148 = vadd.xlane.f32.xlu0 %v147
    %v149 = vpop.xlane.xlu0 %148
    %v150 = vsub.f32 %v146, %v149
    %v151 = vrsqrt.pop %v150
    %v152 = vld [vmem:[#allocation0] sm:$0xff]
    %v153 = vld [vmem:[#allocation1] sm:$0xff]
    %v154 = vmul.f32 %v153, %v144
    %155 = vadd.xlane.f32.xlu0 %v154
    %v156 = vpop.xlane.xlu0 %155
    %v157 = vsub.f32 %v152, %v156
    %v158 = vmul.f32 %v157, %v151
    %vm159 = vcmask 1047557
    %vm160 = vmand %vm142, %vm159
    %v161 = vsel %vm160, %v158, 0.0
    %v162 = vadd.f32 %v153, %v161
    %163 = vst [vmem:[#allocation1] sm:$0xff] %v162
    %vm164 = vcmask 56368
    %s165 = scalar_lea.vmem [#allocation1], 6
    %v166 = vld [vmem:[%s165] ss:$0 sm:$0xff]
    %s167 = scalar_lea.vmem [#allocation0], 6
    %v168 = vld [vmem:[%s167] ss:$0 sm:$0xff]
    %v169 = vmul.f32 %v166, %v166
    %170 = vadd.xlane.f32.xlu0 %v169
    %v171 = vpop.xlane.xlu0 %170
    %v172 = vsub.f32 %v168, %v171
    %v173 = vrsqrt.pop %v172
    %v174 = vld [vmem:[#allocation0] sm:$0xff]
    %v175 = vld [vmem:[#allocation1] sm:$0xff]
    %v176 = vmul.f32 %v175, %v166
    %177 = vadd.xlane.f32.xlu0 %v176
    %v178 = vpop.xlane.xlu0 %177
    %v179 = vsub.f32 %v174, %v178
    %v180 = vmul.f32 %v179, %v173
    %vm181 = vcmask 1047558
    %vm182 = vmand %vm164, %vm181
    %v183 = vsel %vm182, %v180, 0.0
    %v184 = vadd.f32 %v175, %v183
    %185 = vst [vmem:[#allocation1] sm:$0xff] %v184
    %vm186 = vcmask 64568
    %s187 = scalar_lea.vmem [#allocation1], 7
    %v188 = vld [vmem:[%s187] ss:$0 sm:$0xff]
    %s189 = scalar_lea.vmem [#allocation0], 7
    %v190 = vld [vmem:[%s189] ss:$0 sm:$0xff]
    %v191 = vmul.f32 %v188, %v188
    %192 = vadd.xlane.f32.xlu0 %v191
    %v193 = vpop.xlane.xlu0 %192
    %v194 = vsub.f32 %v190, %v193
    %v195 = vrsqrt.pop %v194
    %v196 = vld [vmem:[#allocation0] sm:$0xff]
    %v197 = vld [vmem:[#allocation1] sm:$0xff]
    %v198 = vmul.f32 %v197, %v188
    %199 = vadd.xlane.f32.xlu0 %v198
    %v200 = vpop.xlane.xlu0 %199
    %v201 = vsub.f32 %v196, %v200
    %v202 = vmul.f32 %v201, %v195
    %vm203 = vcmask 1047559
    %vm204 = vmand %vm186, %vm203
    %v205 = vsel %vm204, %v202, 0.0
    %v206 = vadd.f32 %v197, %v205
    %207 = vst [vmem:[#allocation1] sm:$0xff] %v206
    // Predicated region
    $region36: #{custom-call.6} parent=1 // pred_check
      _
    $region37: #{custom-call.6} parent=1 // pred_check_branch
      %209 = sbr.rel (0) target = $region39
    $region38: #{custom-call.6} parent=1 // pred_region
      // Predicated region
      $region40: #{custom-call.6} parent=38 // pred_check
        _
      $region41: #{custom-call.6} parent=38 // pred_check_branch
        %211 = sbr.rel (0) target = $region43
      $region42: #{custom-call.6} parent=38 // pred_region
        // Predicated region
        $region55: #{custom-call.6} parent=42 // pred_check
          _
        $region56: #{custom-call.6} parent=42 // pred_check_branch
          %227 = sbr.rel (0) target = $region58
        $region57: #{custom-call.6} parent=42 // pred_region
          loop: start=0, step=1, limit=1
          $region59: #{custom-call.6} parent=57 // loop_pre_header
            _
          $region60: #{custom-call.6} parent=57 // loop_header
            %s229 = sphi 0, %s233
            %p230 = scmp.ge.s32.totalorder %s229, 1
            %s234 = sphi [#allocation1], [#allocation1]
            %s235 = sphi %s1, %s1
          $region61: #{custom-call.6} parent=57 // loop_header_branch
            %232 = sbr.rel (%p230) target = $region65
          $region62: #{custom-call.6} parent=57 // loop_body
            %v236 = vld [vmem:[%s234] sm:$0xff]
            %237 = vst [vmem:[%s235] sm:$0xff] %v236
          $region63: #{custom-call.6} parent=57 // loop_footer
            %s233 = sadd.s32 1, %s229
          $region64: #{custom-call.6} parent=57 // loop_footer_branch
            %228 = sbr.rel target = $region60
          $region65: #{custom-call.6} parent=57 // loop_exit
            _
        $region58: #{custom-call.6} parent=42 // pred_fallthru
          _
        // Predicated region
        $region66: #{custom-call.6} parent=42 // pred_check
          _
        $region67: #{custom-call.6} parent=42 // pred_check_branch
          %239 = sbr.rel target = $region69
        $region68: #{custom-call.6} parent=42 // pred_region
          _
        $region69: #{custom-call.6} parent=42 // pred_fallthru
          _
      $region43: #{custom-call.6} parent=38 // pred_fallthru
        _
      // Predicated region
      $region44: #{custom-call.6} parent=38 // pred_check
        _
      $region45: #{custom-call.6} parent=38 // pred_check_branch
        %213 = sbr.rel target = $region47
      $region46: #{custom-call.6} parent=38 // pred_region
        %s215 = ssub.s32 256, 1
        loop: start=0, step=1, limit=1
        $region48: #{custom-call.6} parent=46 // loop_pre_header
          _
        $region49: #{custom-call.6} parent=46 // loop_header
          %s217 = sphi 0, %s221
          %p218 = scmp.ge.s32.totalorder %s217, 1
          %s222 = sphi [#allocation1], [#allocation1]
          %s223 = sphi %s1, %s1
        $region50: #{custom-call.6} parent=46 // loop_header_branch
          %220 = sbr.rel (%p218) target = $region54
        $region51: #{custom-call.6} parent=46 // loop_body
          %v224 = vld [vmem:[%s222] sm:%s215]
          %225 = vst [vmem:[%s223] sm:%s215] %v224
        $region52: #{custom-call.6} parent=46 // loop_footer
          %s221 = sadd.s32 1, %s217
        $region53: #{custom-call.6} parent=46 // loop_footer_branch
          %216 = sbr.rel target = $region49
        $region54: #{custom-call.6} parent=46 // loop_exit
          _
      $region47: #{custom-call.6} parent=38 // pred_fallthru
        _
    $region39: #{custom-call.6} parent=1 // pred_fallthru
      _
    %240 = vnop

// kernel: custom-call.7
$region0: #{custom-call.7}
  %s0 = inlined_call_operand.vmem [shape: f32[1,8,8], index: 0, kind: input, shape index: {}]
  %s1 = inlined_call_operand.vmem [shape: f32[1,8,8], index: 1, kind: output, shape index: {}]
  $region1: #{custom-call.7} parent=0
    #allocation0 [shape = 'u8[4096]{0}', space=vmem, size = 0x1000, scoped, tag = 'operand span for operand 0']
    #allocation1 [shape = 'u8[4096]{0}', space=vmem, size = 0x1000, scoped, tag = 'operand span for operand 1']
    #allocation2 [shape = 'f32[8,8]{1,0}', space=vmem, size = 0x1000, scoped, tag = 'rescaled input a']
    // Predicated region
    $region2: #{custom-call.7} parent=1 // pred_check
      _
    $region3: #{custom-call.7} parent=1 // pred_check_branch
      %3 = sbr.rel (0) target = $region5
    $region4: #{custom-call.7} parent=1 // pred_region
      // Predicated region
      $region6: #{custom-call.7} parent=4 // pred_check
        _
      $region7: #{custom-call.7} parent=4 // pred_check_branch
        %5 = sbr.rel (0) target = $region9
      $region8: #{custom-call.7} parent=4 // pred_region
        // Predicated region
        $region21: #{custom-call.7} parent=8 // pred_check
          _
        $region22: #{custom-call.7} parent=8 // pred_check_branch
          %21 = sbr.rel (0) target = $region24
        $region23: #{custom-call.7} parent=8 // pred_region
          loop: start=0, step=1, limit=1
          $region25: #{custom-call.7} parent=23 // loop_pre_header
            _
          $region26: #{custom-call.7} parent=23 // loop_header
            %s23 = sphi 0, %s27
            %p24 = scmp.ge.s32.totalorder %s23, 1
            %s28 = sphi %s0, %s0
            %s29 = sphi [#allocation0], [#allocation0]
          $region27: #{custom-call.7} parent=23 // loop_header_branch
            %26 = sbr.rel (%p24) target = $region31
          $region28: #{custom-call.7} parent=23 // loop_body
            %v30 = vld [vmem:[%s28] sm:$0xff]
            %31 = vst [vmem:[%s29] sm:$0xff] %v30
          $region29: #{custom-call.7} parent=23 // loop_footer
            %s27 = sadd.s32 1, %s23
          $region30: #{custom-call.7} parent=23 // loop_footer_branch
            %22 = sbr.rel target = $region26
          $region31: #{custom-call.7} parent=23 // loop_exit
            _
        $region24: #{custom-call.7} parent=8 // pred_fallthru
          _
        // Predicated region
        $region32: #{custom-call.7} parent=8 // pred_check
          _
        $region33: #{custom-call.7} parent=8 // pred_check_branch
          %33 = sbr.rel target = $region35
        $region34: #{custom-call.7} parent=8 // pred_region
          _
        $region35: #{custom-call.7} parent=8 // pred_fallthru
          _
      $region9: #{custom-call.7} parent=4 // pred_fallthru
        _
      // Predicated region
      $region10: #{custom-call.7} parent=4 // pred_check
        _
      $region11: #{custom-call.7} parent=4 // pred_check_branch
        %7 = sbr.rel target = $region13
      $region12: #{custom-call.7} parent=4 // pred_region
        %s9 = ssub.s32 256, 1
        loop: start=0, step=1, limit=1
        $region14: #{custom-call.7} parent=12 // loop_pre_header
          _
        $region15: #{custom-call.7} parent=12 // loop_header
          %s11 = sphi 0, %s15
          %p12 = scmp.ge.s32.totalorder %s11, 1
          %s16 = sphi %s0, %s0
          %s17 = sphi [#allocation0], [#allocation0]
        $region16: #{custom-call.7} parent=12 // loop_header_branch
          %14 = sbr.rel (%p12) target = $region20
        $region17: #{custom-call.7} parent=12 // loop_body
          %v18 = vld [vmem:[%s16] sm:%s9]
          %19 = vst [vmem:[%s17] sm:%s9] %v18
        $region18: #{custom-call.7} parent=12 // loop_footer
          %s15 = sadd.s32 1, %s11
        $region19: #{custom-call.7} parent=12 // loop_footer_branch
          %10 = sbr.rel target = $region15
        $region20: #{custom-call.7} parent=12 // loop_exit
          _
      $region13: #{custom-call.7} parent=4 // pred_fallthru
        _
    $region5: #{custom-call.7} parent=1 // pred_fallthru
      _
    %34 = vnop
    %v35 = vlaneseq
    %v36 = vand.u32 %v35, 127
    %vm37 = vcmp.lt.s32.totalorder %v36, 8
    %v38 = vlaneseq
    %v39 = vshrl.u32 %v38, 7
    %vm41 = vcmp.eq.s32.totalorder %v39, %v36
    %v42 = vld [vmem:[#allocation0] sm:$0xff]
    %v43 = vsel %vm41, %v42, 0.0
    %44 = vadd.xlane.f32.xlu0 %v43
    %v45 = vpop.xlane.xlu0 %44
    %vm46 = vcmp.ge.s32.totalorder %v39, %v36
    %vm47 = vmand %vm46, %vm37
    %v48 = vsel %vm47, %v42, 0.0
    %v49 = vrcp.pop %v45
    %v50 = vmul.f32 %v48, %v49
    %51 = vst [vmem:[#allocation2] sm:$0xff] %v50
    %v52 = vlaneseq
    %v53 = vand.u32 %v52, 127
    %v54 = vlaneseq
    %v55 = vshrl.u32 %v54, 7
    %vm57 = vcmp.eq.s32.totalorder %v53, %v55
    %v58 = vlaneseq
    %v59 = vand.u32 %v58, 127
    %vm60 = vcmp.eq.s32.totalorder %v59, 0
    %v61 = vsel %vm60, 1.0, -1.0
    %v62 = vsel %vm57, %v61, 0.0
    %s63 = scalar_lea.vmem [#allocation2], 1
    %v64 = vld [vmem:[%s63] ss:$0 sm:$0xff]
    %v65 = vxor.u32 %v64, 2147483648
    %v66 = vlaneseq
    %v67 = vand.u32 %v66, 127
    %vm68 = vcmp.eq.s32.totalorder %v67, 1
    %v69 = vmul.f32 %v65, %v62
    %70 = vadd.xlane.f32.xlu0 %v69
    %v71 = vpop.xlane.xlu0 %70
    %v72 = vsel %vm68, %v71, %v62
    %s73 = scalar_lea.vmem [#allocation2], 2
    %v74 = vld [vmem:[%s73] ss:$0 sm:$0xff]
    %v75 = vxor.u32 %v74, 2147483648
    %v76 = vlaneseq
    %v77 = vand.u32 %v76, 127
    %vm78 = vcmp.eq.s32.totalorder %v77, 2
    %v79 = vmul.f32 %v75, %v72
    %80 = vadd.xlane.f32.xlu0 %v79
    %v81 = vpop.xlane.xlu0 %80
    %v82 = vsel %vm78, %v81, %v72
    %s83 = scalar_lea.vmem [#allocation2], 3
    %v84 = vld [vmem:[%s83] ss:$0 sm:$0xff]
    %v85 = vxor.u32 %v84, 2147483648
    %v86 = vlaneseq
    %v87 = vand.u32 %v86, 127
    %vm88 = vcmp.eq.s32.totalorder %v87, 3
    %v89 = vmul.f32 %v85, %v82
    %90 = vadd.xlane.f32.xlu0 %v89
    %v91 = vpop.xlane.xlu0 %90
    %v92 = vsel %vm88, %v91, %v82
    %s93 = scalar_lea.vmem [#allocation2], 4
    %v94 = vld [vmem:[%s93] ss:$0 sm:$0xff]
    %v95 = vxor.u32 %v94, 2147483648
    %v96 = vlaneseq
    %v97 = vand.u32 %v96, 127
    %vm98 = vcmp.eq.s32.totalorder %v97, 4
    %v99 = vmul.f32 %v95, %v92
    %100 = vadd.xlane.f32.xlu0 %v99
    %v101 = vpop.xlane.xlu0 %100
    %v102 = vsel %vm98, %v101, %v92
    %s103 = scalar_lea.vmem [#allocation2], 5
    %v104 = vld [vmem:[%s103] ss:$0 sm:$0xff]
    %v105 = vxor.u32 %v104, 2147483648
    %v106 = vlaneseq
    %v107 = vand.u32 %v106, 127
    %vm108 = vcmp.eq.s32.totalorder %v107, 5
    %v109 = vmul.f32 %v105, %v102
    %110 = vadd.xlane.f32.xlu0 %v109
    %v111 = vpop.xlane.xlu0 %110
    %v112 = vsel %vm108, %v111, %v102
    %s113 = scalar_lea.vmem [#allocation2], 6
    %v114 = vld [vmem:[%s113] ss:$0 sm:$0xff]
    %v115 = vxor.u32 %v114, 2147483648
    %v116 = vlaneseq
    %v117 = vand.u32 %v116, 127
    %vm118 = vcmp.eq.s32.totalorder %v117, 6
    %v119 = vmul.f32 %v115, %v112
    %120 = vadd.xlane.f32.xlu0 %v119
    %v121 = vpop.xlane.xlu0 %120
    %v122 = vsel %vm118, %v121, %v112
    %s123 = scalar_lea.vmem [#allocation2], 7
    %v124 = vld [vmem:[%s123] ss:$0 sm:$0xff]
    %v125 = vxor.u32 %v124, 2147483648
    %v126 = vlaneseq
    %v127 = vand.u32 %v126, 127
    %vm128 = vcmp.eq.s32.totalorder %v127, 7
    %v129 = vmul.f32 %v125, %v122
    %130 = vadd.xlane.f32.xlu0 %v129
    %v131 = vpop.xlane.xlu0 %130
    %v132 = vsel %vm128, %v131, %v122
    %v133 = vrcp.pop %v45
    %v134 = vmul.f32 %v132, %v133
    %vm135 = vweird.f32 %v45
    %v136 = vsel %vm135, %v132, %v134
    %137 = vst [vmem:[#allocation1] sm:$0xff] %v136
    // Predicated region
    $region36: #{custom-call.7} parent=1 // pred_check
      _
    $region37: #{custom-call.7} parent=1 // pred_check_branch
      %139 = sbr.rel (0) target = $region39
    $region38: #{custom-call.7} parent=1 // pred_region
      // Predicated region
      $region40: #{custom-call.7} parent=38 // pred_check
        _
      $region41: #{custom-call.7} parent=38 // pred_check_branch
        %141 = sbr.rel (0) target = $region43
      $region42: #{custom-call.7} parent=38 // pred_region
        // Predicated region
        $region55: #{custom-call.7} parent=42 // pred_check
          _
        $region56: #{custom-call.7} parent=42 // pred_check_branch
          %157 = sbr.rel (0) target = $region58
        $region57: #{custom-call.7} parent=42 // pred_region
          loop: start=0, step=1, limit=1
          $region59: #{custom-call.7} parent=57 // loop_pre_header
            _
          $region60: #{custom-call.7} parent=57 // loop_header
            %s159 = sphi 0, %s163
            %p160 = scmp.ge.s32.totalorder %s159, 1
            %s164 = sphi [#allocation1], [#allocation1]
            %s165 = sphi %s1, %s1
          $region61: #{custom-call.7} parent=57 // loop_header_branch
            %162 = sbr.rel (%p160) target = $region65
          $region62: #{custom-call.7} parent=57 // loop_body
            %v166 = vld [vmem:[%s164] sm:$0xff]
            %167 = vst [vmem:[%s165] sm:$0xff] %v166
          $region63: #{custom-call.7} parent=57 // loop_footer
            %s163 = sadd.s32 1, %s159
          $region64: #{custom-call.7} parent=57 // loop_footer_branch
            %158 = sbr.rel target = $region60
          $region65: #{custom-call.7} parent=57 // loop_exit
            _
        $region58: #{custom-call.7} parent=42 // pred_fallthru
          _
        // Predicated region
        $region66: #{custom-call.7} parent=42 // pred_check
          _
        $region67: #{custom-call.7} parent=42 // pred_check_branch
          %169 = sbr.rel target = $region69
        $region68: #{custom-call.7} parent=42 // pred_region
          _
        $region69: #{custom-call.7} parent=42 // pred_fallthru
          _
      $region43: #{custom-call.7} parent=38 // pred_fallthru
        _
      // Predicated region
      $region44: #{custom-call.7} parent=38 // pred_check
        _
      $region45: #{custom-call.7} parent=38 // pred_check_branch
        %143 = sbr.rel target = $region47
      $region46: #{custom-call.7} parent=38 // pred_region
        %s145 = ssub.s32 256, 1
        loop: start=0, step=1, limit=1
        $region48: #{custom-call.7} parent=46 // loop_pre_header
          _
        $region49: #{custom-call.7} parent=46 // loop_header
          %s147 = sphi 0, %s151
          %p148 = scmp.ge.s32.totalorder %s147, 1
          %s152 = sphi [#allocation1], [#allocation1]
          %s153 = sphi %s1, %s1
        $region50: #{custom-call.7} parent=46 // loop_header_branch
          %150 = sbr.rel (%p148) target = $region54
        $region51: #{custom-call.7} parent=46 // loop_body
          %v154 = vld [vmem:[%s152] sm:%s145]
          %155 = vst [vmem:[%s153] sm:%s145] %v154
        $region52: #{custom-call.7} parent=46 // loop_footer
          %s151 = sadd.s32 1, %s147
        $region53: #{custom-call.7} parent=46 // loop_footer_branch
          %146 = sbr.rel target = $region49
        $region54: #{custom-call.7} parent=46 // loop_exit
          _
      $region47: #{custom-call.7} parent=38 // pred_fallthru
        _
    $region39: #{custom-call.7} parent=1 // pred_fallthru
      _
    %170 = vnop

// kernel: nsf_forward.5
$region0: #{nsf_forward.5}
  #allocation0 [shape = 'u32[]', space=smem, size = 0x4, offset = 0x4, fixed_abs, tag = 'smem constant byte address 0x4 - core index']
  #allocation1 [shape = 'u32[144,128]{1,0:T(1,128)}', space=vmem, size = 0x12000, scoped, tag = 'internal scratch']
  %s0 = inlined_call_operand.vmem [shape: f32[8,2], index: 0, kind: input, shape index: {}]
  %s1 = inlined_call_operand.vmem [shape: f32[2,8], index: 1, kind: input, shape index: {}]
  %s2 = inlined_call_operand.vmem [shape: f32[8,8], index: 2, kind: output, shape index: {}]
  %s3 = sld [smem:[#allocation0]]
  $region18: #{nsf_forward.5} parent=0
    _
  %s5 = ssub.s32 1, %s3
  %s6 = scalar_select 0, %s5, %s3
  // Predicated region
  $region2: #{nsf_forward.5} parent=0 // pred_check
    _
  $region3: #{nsf_forward.5} parent=0 // pred_check_branch
    %8 = sbr.rel (0) target = $region5
  $region4: #{nsf_forward.5} parent=0 // pred_region
    _
  $region5: #{nsf_forward.5} parent=0 // pred_fallthru
    _
  // Predicated region
  $region6: #{nsf_forward.5} parent=0 // pred_check
    _
  $region7: #{nsf_forward.5} parent=0 // pred_check_branch
    %10 = sbr.rel (0) target = $region9
  $region8: #{nsf_forward.5} parent=0 // pred_region
    _
  $region9: #{nsf_forward.5} parent=0 // pred_fallthru
    _
  %v11 = vld [vmem:[%s0] sm:$0xff]
  %v12 = vld [vmem:[%s1] sm:$0x3]
  %14 = vset.pattern.permute.xlu0 0
  %15 = vperm.xlu0 %14, %v11
  %v16 = vpop.permute.xlu0 %15
  %v18 = vlaneseq
  %v19 = vshrl.u32 %v18, 7
  %v20 = vsub.s32 0, %v19
  %v21 = vrot.slane %v12, %v20
  %v22 = vsub.f32 %v16, %v21
  %v23 = vmul.f32 %v22, %v22
  %24 = vset.pattern.permute.xlu0 1
  %25 = vperm.xlu0 %24, %v11
  %v26 = vpop.permute.xlu0 %25
  %v28 = vlaneseq
  %v29 = vshrl.u32 %v28, 7
  %v30 = vsub.s32 1, %v29
  %v31 = vrot.slane %v12, %v30
  %v32 = vsub.f32 %v26, %v31
  %v33 = vmul.f32 %v32, %v32
  %v34 = vadd.f32 %v23, %v33
  %v35 = vmul.f32 %v34, -0.5
  %v36 = vmul.f32 %v35, 1.442695
  %v37 = vpow.pop %v36
  %vm38 = vcmask 64512
  %39 = vst.msk [vmem:[%s2] sm:$0xff] %vm38, %v37
  // Predicated region
  $region10: #{nsf_forward.5} parent=0 // pred_check
    _
  $region11: #{nsf_forward.5} parent=0 // pred_check_branch
    %41 = sbr.rel (0) target = $region13
  $region12: #{nsf_forward.5} parent=0 // pred_region
    _
  $region13: #{nsf_forward.5} parent=0 // pred_fallthru
    _
  // Predicated region
  $region14: #{nsf_forward.5} parent=0 // pred_check
    _
  $region15: #{nsf_forward.5} parent=0 // pred_check_branch
    %43 = sbr.rel (0) target = $region17
  $region16: #{nsf_forward.5} parent=0 // pred_region
    _
  $region17: #{nsf_forward.5} parent=0 // pred_fallthru
    _

// kernel: nsf_forward.6
$region0: #{nsf_forward.6}
  #allocation0 [shape = 'u32[]', space=smem, size = 0x4, offset = 0x4, fixed_abs, tag = 'smem constant byte address 0x4 - core index']
  #allocation1 [shape = 'u32[144,128]{1,0:T(1,128)}', space=vmem, size = 0x12000, scoped, tag = 'internal scratch']
  %s0 = inlined_call_operand.vmem [shape: f32[8,2], index: 0, kind: input, shape index: {}]
  %s1 = inlined_call_operand.vmem [shape: f32[2,16], index: 1, kind: input, shape index: {}]
  %s2 = inlined_call_operand.vmem [shape: f32[8,8], index: 2, kind: input, shape index: {}]
  %s3 = inlined_call_operand.vmem [shape: f32[8,16], index: 3, kind: output, shape index: {}]
  %s4 = sld [smem:[#allocation0]]
  $region22: #{nsf_forward.6} parent=0
    _
  %s6 = ssub.s32 1, %s4
  %s7 = scalar_select 0, %s6, %s4
  // Predicated region
  $region2: #{nsf_forward.6} parent=0 // pred_check
    _
  $region3: #{nsf_forward.6} parent=0 // pred_check_branch
    %9 = sbr.rel (0) target = $region5
  $region4: #{nsf_forward.6} parent=0 // pred_region
    _
  $region5: #{nsf_forward.6} parent=0 // pred_fallthru
    _
  // Predicated region
  $region6: #{nsf_forward.6} parent=0 // pred_check
    _
  $region7: #{nsf_forward.6} parent=0 // pred_check_branch
    %11 = sbr.rel (0) target = $region9
  $region8: #{nsf_forward.6} parent=0 // pred_region
    _
  $region9: #{nsf_forward.6} parent=0 // pred_fallthru
    _
  // Predicated region
  $region10: #{nsf_forward.6} parent=0 // pred_check
    _
  $region11: #{nsf_forward.6} parent=0 // pred_check_branch
    %13 = sbr.rel (0) target = $region13
  $region12: #{nsf_forward.6} parent=0 // pred_region
    _
  $region13: #{nsf_forward.6} parent=0 // pred_fallthru
    _
  %v14 = vld [vmem:[%s0] sm:$0xff]
  %v15 = vld [vmem:[%s1] sm:$0x3]
  %17 = vset.pattern.permute.xlu0 0
  %18 = vperm.xlu0 %17, %v14
  %v19 = vpop.permute.xlu0 %18
  %v21 = vlaneseq
  %v22 = vshrl.u32 %v21, 7
  %v23 = vsub.s32 0, %v22
  %v24 = vrot.slane %v15, %v23
  %v25 = vsub.f32 %v19, %v24
  %v26 = vmul.f32 %v25, %v25
  %27 = vset.pattern.permute.xlu0 1
  %28 = vperm.xlu0 %27, %v14
  %v29 = vpop.permute.xlu0 %28
  %v31 = vlaneseq
  %v32 = vshrl.u32 %v31, 7
  %v33 = vsub.s32 1, %v32
  %v34 = vrot.slane %v15, %v33
  %v35 = vsub.f32 %v29, %v34
  %v36 = vmul.f32 %v35, %v35
  %v37 = vadd.f32 %v26, %v36
  %v38 = vmul.f32 %v37, -0.5
  %v39 = vmul.f32 %v38, 1.442695
  %v40 = vpow.pop %v39
  %v41 = vld [vmem:[%s2] sm:$0xff]
  %vm42 = vcmask 64512
  %v44 = vsel %vm42, %v41, 0
  %46 = vmatprep.subr.mxu0 0.0
  %47 = vmatpush1.msra.mxu0 0.0
  %48 = vmatprep.subr.mxu0 0.0
  %49 = vmatpush1.msra.mxu0 0.0
  %50 = vmatprep.subr.mxu0 0.0
  %51 = vmatpush1.msra.mxu0 0.0
  %52 = vmatprep.subr.mxu0 0.0
  %53 = vmatpush1.msra.mxu0 0.0
  %54 = vmatprep.subr.mxu0 0.0
  %55 = vmatpush1.msra.mxu0 0.0
  %56 = vmatprep.subr.mxu0 0.0
  %57 = vmatpush1.msra.mxu0 0.0
  %58 = vmatprep.subr.mxu0 0.0
  %59 = vmatpush1.msra.mxu0 0.0
  %60 = vmatprep.subr.mxu0 0.0
  %61 = vmatpush1.msra.mxu0 0.0
  %62 = vmatprep.subr.mxu0 0.0
  %63 = vmatpush1.msra.mxu0 0.0
  %64 = vmatprep.subr.mxu0 0.0
  %65 = vmatpush1.msra.mxu0 0.0
  %66 = vmatprep.subr.mxu0 0.0
  %67 = vmatpush1.msra.mxu0 0.0
  %68 = vmatprep.subr.mxu0 0.0
  %69 = vmatpush1.msra.mxu0 0.0
  %70 = vmatprep.subr.mxu0 0.0
  %71 = vmatpush1.msra.mxu0 0.0
  %72 = vmatprep.subr.mxu0 0.0
  %73 = vmatpush1.msra.mxu0 0.0
  %74 = vmatprep.subr.mxu0 0.0
  %75 = vmatpush1.msra.mxu0 0.0
  %76 = vmatprep.subr.mxu0 0.0
  %77 = vmatpush1.msra.mxu0 %v40
  %78 = vmatprep.subr.mxu0 0.0
  %79 = vmatpush2.msra.mxu0 0.0
  %80 = vmatprep.subr.mxu0 0.0
  %81 = vmatpush2.msra.mxu0 0.0
  %82 = vmatprep.subr.mxu0 0.0
  %83 = vmatpush2.msra.mxu0 0.0
  %84 = vmatprep.subr.mxu0 0.0
  %85 = vmatpush2.msra.mxu0 0.0
  %86 = vmatprep.subr.mxu0 0.0
  %87 = vmatpush2.msra.mxu0 0.0
  %88 = vmatprep.subr.mxu0 0.0
  %89 = vmatpush2.msra.mxu0 0.0
  %90 = vmatprep.subr.mxu0 0.0
  %91 = vmatpush2.msra.mxu0 0.0
  %92 = vmatprep.subr.mxu0 0.0
  %93 = vmatpush2.msra.mxu0 0.0
  %94 = vmatprep.subr.mxu0 0.0
  %95 = vmatpush2.msra.mxu0 0.0
  %96 = vmatprep.subr.mxu0 0.0
  %97 = vmatpush2.msra.mxu0 0.0
  %98 = vmatprep.subr.mxu0 0.0
  %99 = vmatpush2.msra.mxu0 0.0
  %100 = vmatprep.subr.mxu0 0.0
  %101 = vmatpush2.msra.mxu0 0.0
  %102 = vmatprep.subr.mxu0 0.0
  %103 = vmatpush2.msra.mxu0 0.0
  %104 = vmatprep.subr.mxu0 0.0
  %105 = vmatpush2.msra.mxu0 0.0
  %106 = vmatprep.subr.mxu0 0.0
  %107 = vmatpush2.msra.mxu0 0.0
  %108 = vmatprep.subr.mxu0 0.0
  %109 = vmatpush2.msra.mxu0 0.0
  %110 = vmatprep.mubr.f32.mxu0 0.0
  %111 = vmatmul.mubr.f32.gmra.mxu0 %v44
  %v112 = vpop.f32.mrf.mxu0
  %v113 = vadd.f32 0.0, %v112
  %v114 = vpop.f32.mrf.mxu0
  %115 = vdwg.mxu0
  %vm116 = vcmask 130048
  %117 = vst.msk [vmem:[%s3] sm:$0xff] %vm116, %v113
  // Predicated region
  $region14: #{nsf_forward.6} parent=0 // pred_check
    _
  $region15: #{nsf_forward.6} parent=0 // pred_check_branch
    %119 = sbr.rel (0) target = $region17
  $region16: #{nsf_forward.6} parent=0 // pred_region
    _
  $region17: #{nsf_forward.6} parent=0 // pred_fallthru
    _
  // Predicated region
  $region18: #{nsf_forward.6} parent=0 // pred_check
    _
  $region19: #{nsf_forward.6} parent=0 // pred_check_branch
    %121 = sbr.rel (0) target = $region21
  $region20: #{nsf_forward.6} parent=0 // pred_region
    _
  $region21: #{nsf_forward.6} parent=0 // pred_fallthru
    _

// kernel: nsf_forward.7
$region0: #{nsf_forward.7}
  #allocation0 [shape = 'u32[]', space=smem, size = 0x4, offset = 0x4, fixed_abs, tag = 'smem constant byte address 0x4 - core index']
  #allocation1 [shape = 'u32[144,128]{1,0:T(1,128)}', space=vmem, size = 0x12000, scoped, tag = 'internal scratch']
  %s0 = inlined_call_operand.vmem [shape: f32[4,8,8], index: 0, kind: input, shape index: {}]
  %s1 = inlined_call_operand.vmem [shape: f32[8,8], index: 1, kind: input, shape index: {}]
  %s2 = inlined_call_operand.hbm [shape: f32[4,8,8], index: 2, kind: output, shape index: {0}]
  %s3 = inlined_call_operand.vmem [shape: f32[4,8,8], index: 3, kind: output, shape index: {1}]
  %4 = xla_tuple %s2, %s3
  %s5 = sld [smem:[#allocation0]]
  $region49: #{nsf_forward.7} parent=0
    _
  %s7 = ssub.s32 1, %s5
  %s8 = scalar_select 0, %s7, %s5
  $region1: #{nsf_forward.7} parent=0
    #allocation2 [shape = 'u8[8192]{0}', space=vmem, size = 0x2000, scoped, tag = 'output window, operand 0']
    #allocation3 [shape = 's32[2]{0}', space=sflag, size = 0x8, scoped, tag = 'scoped memory for nsf_forward.7']
    %9 = vsyncpa [#allocation3], 0
    %s10 = scalar_lea.sflag [#allocation3], 1
    %11 = vsyncpa %s10, 0
    loop: start=0, step=1, limit=6
    $region2: #{nsf_forward.7} parent=1 // loop_pre_header
      _
    $region3: #{nsf_forward.7} parent=1 // loop_header
      %s13 = sphi 0, %s17
      %p14 = scmp.ge.s32.totalorder %s13, 6
      %s23 = sphi 0, %s25
      %s26 = sphi 0, %s23
      %s27 = sphi 0, %s26
      %s43 = sphi 0, %s27
      %s47 = sphi 0, %s47
      %s49 = sphi 0, %s47
      %s50 = sphi 0, %s49
      %s64 = sphi 0, %s50
      %s70 = sphi 0, %s72
      %s73 = sphi 0, %s70
      %s74 = sphi 0, %s73
      %s90 = sphi 0, %s74
      %s96 = sphi 0, %s98
      %s99 = sphi 0, %s96
      %s100 = sphi 0, %s99
      %s116 = sphi 0, %s100
    $region4: #{nsf_forward.7} parent=1 // loop_header_branch
      %16 = sbr.rel (%p14) target = $region8
    $region5: #{nsf_forward.7} parent=1 // loop_body
      %s18 = ssub.s32 %s13, 1
      %s19 = ssub.s32 %s13, 2
      %s20 = sadd.s32 %s13, 1
      %s21 = ssub.s32 %s13, %s20
      %p22 = scmp.eq.s32.totalorder %s21, 0
      %s24 = sadd.s32 %s23, 1
      %s25 = scalar_select %p22, %s23, %s24
      %p28 = pneg %p22
      %p29 = scmp.eq.s32.totalorder %s13, 3
      %p30 = por %p28, %p29
      %p31 = scmp.ne.s32.totalorder %s23, %s26
      %p32 = scmp.eq.s32.totalorder %s13, 0
      %p33 = por %p31, %p32
      %p34 = scmp.ne.s32.totalorder %s23, %s26
      %p35 = scmp.eq.s32.totalorder %s18, 3
      %p36 = por %p34, %p35
      %p37 = scmp.ne.s32.totalorder %s26, %s27
      %p38 = scmp.eq.s32.totalorder %s18, 0
      %p39 = por %p37, %p38
      %p40 = scmp.ne.s32.totalorder %s26, %s27
      %p41 = scmp.eq.s32.totalorder %s19, 3
      %p42 = por %p40, %p41
      %p44 = scmp.ne.s32.totalorder %s27, %s43
      %p45 = scmp.eq.s32.totalorder %s19, 0
      %p46 = por %p44, %p45
      %s48 = sadd.s32 %s47, 1
      %p51 = scmp.eq.s32.totalorder %s13, 3
      %p52 = scmp.ne.s32.totalorder %s47, %s49
      %p53 = scmp.eq.s32.totalorder %s13, 0
      %p54 = por %p52, %p53
      %p55 = scmp.ne.s32.totalorder %s47, %s49
      %p56 = scmp.eq.s32.totalorder %s18, 3
      %p57 = por %p55, %p56
      %p58 = scmp.ne.s32.totalorder %s49, %s50
      %p59 = scmp.eq.s32.totalorder %s18, 0
      %p60 = por %p58, %p59
      %p61 = scmp.ne.s32.totalorder %s49, %s50
      %p62 = scmp.eq.s32.totalorder %s19, 3
      %p63 = por %p61, %p62
      %p65 = scmp.ne.s32.totalorder %s50, %s64
      %p66 = scmp.eq.s32.totalorder %s19, 0
      %p67 = por %p65, %p66
      %s68 = ssub.s32 %s13, %s20
      %p69 = scmp.eq.s32.totalorder %s68, 0
      %s71 = sadd.s32 %s70, 1
      %s72 = scalar_select %p69, %s70, %s71
      %p75 = pneg %p69
      %p76 = scmp.eq.s32.totalorder %s13, 3
      %p77 = por %p75, %p76
      %p78 = scmp.ne.s32.totalorder %s70, %s73
      %p79 = scmp.eq.s32.totalorder %s13, 0
      %p80 = por %p78, %p79
      %p81 = scmp.ne.s32.totalorder %s70, %s73
      %p82 = scmp.eq.s32.totalorder %s18, 3
      %p83 = por %p81, %p82
      %p84 = scmp.ne.s32.totalorder %s73, %s74
      %p85 = scmp.eq.s32.totalorder %s18, 0
      %p86 = por %p84, %p85
      %p87 = scmp.ne.s32.totalorder %s73, %s74
      %p88 = scmp.eq.s32.totalorder %s19, 3
      %p89 = por %p87, %p88
      %p91 = scmp.ne.s32.totalorder %s74, %s90
      %p92 = scmp.eq.s32.totalorder %s19, 0
      %p93 = por %p91, %p92
      %s94 = ssub.s32 %s13, %s20
      %p95 = scmp.eq.s32.totalorder %s94, 0
      %s97 = sadd.s32 %s96, 1
      %s98 = scalar_select %p95, %s96, %s97
      %p101 = pneg %p95
      %p102 = scmp.eq.s32.totalorder %s13, 3
      %p103 = por %p101, %p102
      %p104 = scmp.ne.s32.totalorder %s96, %s99
      %p105 = scmp.eq.s32.totalorder %s13, 0
      %p106 = por %p104, %p105
      %p107 = scmp.ne.s32.totalorder %s96, %s99
      %p108 = scmp.eq.s32.totalorder %s18, 3
      %p109 = por %p107, %p108
      %p110 = scmp.ne.s32.totalorder %s99, %s100
      %p111 = scmp.eq.s32.totalorder %s18, 0
      %p112 = por %p110, %p111
      %p113 = scmp.ne.s32.totalorder %s99, %s100
      %p114 = scmp.eq.s32.totalorder %s19, 3
      %p115 = por %p113, %p114
      %p117 = scmp.ne.s32.totalorder %s100, %s116
      %p118 = scmp.eq.s32.totalorder %s19, 0
      %p119 = por %p117, %p118
      %p120 = scmp.le.s32.totalorder 1, %s13
      %p121 = scmp.lt.s32.totalorder %s13, 5
      %p122 = pnand %p120, %p121
      %p123 = pneg %p122
      // Predicated region
      $region9: #{nsf_forward.7} parent=5 // pred_check
        _
      $region10: #{nsf_forward.7} parent=5 // pred_check_branch
        %125 = sbr.rel (%p122) target = $region12
      $region11: #{nsf_forward.7} parent=5 // pred_region
        %s126 = ssub.s32 %s13, 1
        // Predicated region
        $region13: #{nsf_forward.7} parent=11 // pred_check
          %p127 = pneg %p60
        $region14: #{nsf_forward.7} parent=11 // pred_check_branch
          %129 = sbr.rel (%p127) target = $region16
        $region15: #{nsf_forward.7} parent=11 // pred_region
          _
        $region16: #{nsf_forward.7} parent=11 // pred_fallthru
          _
      $region12: #{nsf_forward.7} parent=5 // pred_fallthru
        _
      %p130 = scmp.lt.s32.totalorder %s13, 4
      // Predicated region
      $region17: #{nsf_forward.7} parent=5 // pred_check
        %p131 = pneg %p130
      $region18: #{nsf_forward.7} parent=5 // pred_check_branch
        %133 = sbr.rel (%p131) target = $region20
      $region19: #{nsf_forward.7} parent=5 // pred_region
        // Predicated region
        $region21: #{nsf_forward.7} parent=19 // pred_check
          %p134 = pneg %p33
        $region22: #{nsf_forward.7} parent=19 // pred_check_branch
          %136 = sbr.rel (%p134) target = $region24
        $region23: #{nsf_forward.7} parent=19 // pred_region
          %p137 = scmp.lt.s32.totalorder %s13, 3
          %s138 = scalar_select %p137, %s13, 3
          %s139 = smul.addr %s138, 8
          %s140 = scalar_lea.vmem %s0, %s139
        $region24: #{nsf_forward.7} parent=19 // pred_fallthru
          _
      $region20: #{nsf_forward.7} parent=5 // pred_fallthru
        _
      %p141 = scmp.le.s32.totalorder 1, %s13
      %p142 = scmp.lt.s32.totalorder %s13, 5
      %p143 = pnand %p141, %p142
      %p144 = pneg %p143
      // Predicated region
      $region25: #{nsf_forward.7} parent=5 // pred_check
        _
      $region26: #{nsf_forward.7} parent=5 // pred_check_branch
        %146 = sbr.rel (%p143) target = $region28
      $region27: #{nsf_forward.7} parent=5 // pred_region
        %s147 = ssub.s32 %s13, 1
        %p148 = scmp.lt.s32.totalorder %s18, 3
        %s149 = scalar_select %p148, %s18, 3
        %s150 = smul.addr %s149, 8
        %s151 = scalar_lea.vmem %s0, %s150
        %p152 = pneg %p39
        %p153 = pneg %p36
        %p154 = pneg %p60
        %p155 = pneg %p57
        %p156 = pneg %p86
        %p157 = pneg %p83
        %s158 = sand.u32 %s73, 1
        %s159 = scalar_lea.sflag [#allocation3], %s158
        %s160 = sand.u32 %s73, 1
        %s161 = smul.addr %s160, 8
        %s162 = scalar_lea.vmem [#allocation2], %s161
        %p163 = pneg %p112
        %p164 = pneg %p109
        %p165 = scmp.lt.s32.totalorder %s18, 3
        %s166 = scalar_select %p165, %s18, 3
        %s167 = smul.addr %s166, 8
        %s168 = scalar_lea.vmem %s3, %s167
        %p169 = scmp.lt.s32.totalorder %s18, 3
        %s170 = scalar_select %p169, %s18, 3
        %s171 = smul.addr %s170, 8
        %s172 = scalar_lea.vmem %s0, %s171
        %p173 = scmp.lt.s32.totalorder %s18, 3
        %s174 = scalar_select %p173, %s18, 3
        %s175 = smul.addr %s174, 8
        %s176 = scalar_lea.vmem %s3, %s175
        %v177 = vld [vmem:[%s172] sm:$0xff]
        %v178 = vlaneseq
        %v179 = vshrl.u32 %v178, 7
        %v180 = vlaneseq
        %v181 = vand.u32 %v180, 127
        %vm182 = vcmp.eq.s32.totalorder %v179, %v181
        %v183 = vsel %vm182, %v177, 0.0
        %v184 = vmul.f32 %v183, 1.442695
        %v185 = vpow.pop %v184
        %vm186 = vcmp.gt.s32.totalorder %v179, %v181
        %v187 = vsel %vm186, %v177, 0.0
        %v188 = vsel %vm182, %v185, 0.0
        %v189 = vadd.f32 %v187, %v188
        %vm190 = vcmask 64512
        %191 = vst.msk [vmem:[%s162] sm:$0xff] %vm190, %v189
        %v193 = vsel %vm190, %v189, 0
        %195 = vmatprep.subr.mxu0 0.0
        %196 = vmatpush1.xpose.msra.mxu0 0.0
        %197 = vmatprep.subr.mxu0 0.0
        %198 = vmatpush1.xpose.msra.mxu0 0.0
        %199 = vmatprep.subr.mxu0 0.0
        %200 = vmatpush1.xpose.msra.mxu0 0.0
        %201 = vmatprep.subr.mxu0 0.0
        %202 = vmatpush1.xpose.msra.mxu0 0.0
        %203 = vmatprep.subr.mxu0 0.0
        %204 = vmatpush1.xpose.msra.mxu0 0.0
        %205 = vmatprep.subr.mxu0 0.0
        %206 = vmatpush1.xpose.msra.mxu0 0.0
        %207 = vmatprep.subr.mxu0 0.0
        %208 = vmatpush1.xpose.msra.mxu0 0.0
        %209 = vmatprep.subr.mxu0 0.0
        %210 = vmatpush1.xpose.msra.mxu0 0.0
        %211 = vmatprep.subr.mxu0 0.0
        %212 = vmatpush1.xpose.msra.mxu0 0.0
        %213 = vmatprep.subr.mxu0 0.0
        %214 = vmatpush1.xpose.msra.mxu0 0.0
        %215 = vmatprep.subr.mxu0 0.0
        %216 = vmatpush1.xpose.msra.mxu0 0.0
        %217 = vmatprep.subr.mxu0 0.0
        %218 = vmatpush1.xpose.msra.mxu0 0.0
        %219 = vmatprep.subr.mxu0 0.0
        %220 = vmatpush1.xpose.msra.mxu0 0.0
        %221 = vmatprep.subr.mxu0 0.0
        %222 = vmatpush1.xpose.msra.mxu0 0.0
        %223 = vmatprep.subr.mxu0 0.0
        %224 = vmatpush1.xpose.msra.mxu0 0.0
        %225 = vmatprep.subr.mxu0 0.0
        %226 = vmatpush1.xpose.msra.mxu0 %v193
        %227 = vmatprep.subr.mxu0 0.0
        %228 = vmatpush2.xpose.msra.mxu0 0.0
        %229 = vmatprep.subr.mxu0 0.0
        %230 = vmatpush2.xpose.msra.mxu0 0.0
        %231 = vmatprep.subr.mxu0 0.0
        %232 = vmatpush2.xpose.msra.mxu0 0.0
        %233 = vmatprep.subr.mxu0 0.0
        %234 = vmatpush2.xpose.msra.mxu0 0.0
        %235 = vmatprep.subr.mxu0 0.0
        %236 = vmatpush2.xpose.msra.mxu0 0.0
        %237 = vmatprep.subr.mxu0 0.0
        %238 = vmatpush2.xpose.msra.mxu0 0.0
        %239 = vmatprep.subr.mxu0 0.0
        %240 = vmatpush2.xpose.msra.mxu0 0.0
        %241 = vmatprep.subr.mxu0 0.0
        %242 = vmatpush2.xpose.msra.mxu0 0.0
        %243 = vmatprep.subr.mxu0 0.0
        %244 = vmatpush2.xpose.msra.mxu0 0.0
        %245 = vmatprep.subr.mxu0 0.0
        %246 = vmatpush2.xpose.msra.mxu0 0.0
        %247 = vmatprep.subr.mxu0 0.0
        %248 = vmatpush2.xpose.msra.mxu0 0.0
        %249 = vmatprep.subr.mxu0 0.0
        %250 = vmatpush2.xpose.msra.mxu0 0.0
        %251 = vmatprep.subr.mxu0 0.0
        %252 = vmatpush2.xpose.msra.mxu0 0.0
        %253 = vmatprep.subr.mxu0 0.0
        %254 = vmatpush2.xpose.msra.mxu0 0.0
        %255 = vmatprep.subr.mxu0 0.0
        %256 = vmatpush2.xpose.msra.mxu0 0.0
        %257 = vmatprep.subr.mxu0 0.0
        %258 = vmatpush2.xpose.msra.mxu0 0.0
        %259 = vmatprep.mubr.f32.mxu0 0.0
        %260 = vmatmul.mubr.f32.gmra.mxu0 %v193
        %v261 = vpop.f32.mrf.mxu0
        %v262 = vadd.f32 0.0, %v261
        %v263 = vpop.f32.mrf.mxu0
        %264 = vdwg.mxu0
        %v265 = vld [vmem:[%s1] sm:$0xff]
        %v266 = vsub.f32 %v262, %v265
        %267 = vst.msk [vmem:[%s176] sm:$0xff] %vm190, %v266
        %s268 = sand.u32 %s73, 1
        %s269 = scalar_lea.sflag [#allocation3], %s268
        %s270 = sand.u32 %s73, 1
        %s271 = smul.addr %s270, 8
        %s272 = scalar_lea.vmem [#allocation2], %s271
        %p273 = scmp.lt.s32.totalorder %s18, 3
        %s274 = scalar_select %p273, %s18, 3
        %s275 = smul.addr %s274, 8
        %s276 = scalar_lea.vmem %s3, %s275
        // Predicated region
        $region29: #{nsf_forward.7} parent=27 // pred_check
          %p277 = pneg %p83
        $region30: #{nsf_forward.7} parent=27 // pred_check_branch
          %279 = sbr.rel (%p277) target = $region32
        $region31: #{nsf_forward.7} parent=27 // pred_region
          %s281 = ssub.s32 128, 128
          %282 = vsyncadd %s269, %s281
          %s283 = smul.addr %s18, 128
          %s284 = scalar_lea.hbm %s2, %s283
          %s286 = sshll.u32 %s272, 4
          %s287 = int_to_ptr.vmem [resolvable:$true] %s286
          %289 = dma.vmem_to_hbm [thread:$0]  %s287, 128, %s284, %s269
        $region32: #{nsf_forward.7} parent=27 // pred_fallthru
          _
        // Predicated region
        $region33: #{nsf_forward.7} parent=27 // pred_check
          %p290 = pneg %p109
        $region34: #{nsf_forward.7} parent=27 // pred_check_branch
          %292 = sbr.rel (%p290) target = $region36
        $region35: #{nsf_forward.7} parent=27 // pred_region
          _
        $region36: #{nsf_forward.7} parent=27 // pred_fallthru
          _
      $region28: #{nsf_forward.7} parent=5 // pred_fallthru
        _
      %p293 = scmp.le.s32.totalorder 2, %s13
      // Predicated region
      $region37: #{nsf_forward.7} parent=5 // pred_check
        %p294 = pneg %p293
      $region38: #{nsf_forward.7} parent=5 // pred_check_branch
        %296 = sbr.rel (%p294) target = $region40
      $region39: #{nsf_forward.7} parent=5 // pred_region
        %s297 = ssub.s32 %s13, 2
        // Predicated region
        $region41: #{nsf_forward.7} parent=39 // pred_check
          %p298 = pneg %p89
        $region42: #{nsf_forward.7} parent=39 // pred_check_branch
          %300 = sbr.rel (%p298) target = $region44
        $region43: #{nsf_forward.7} parent=39 // pred_region
          %s301 = sand.u32 %s74, 1
          %s302 = scalar_lea.sflag [#allocation3], %s301
          %s303 = sand.u32 %s74, 1
          %s304 = smul.addr %s303, 8
          %s305 = scalar_lea.vmem [#allocation2], %s304
          %306 = dma.done %s302, 128
        $region44: #{nsf_forward.7} parent=39 // pred_fallthru
          _
        // Predicated region
        $region45: #{nsf_forward.7} parent=39 // pred_check
          %p307 = pneg %p115
        $region46: #{nsf_forward.7} parent=39 // pred_check_branch
          %309 = sbr.rel (%p307) target = $region48
        $region47: #{nsf_forward.7} parent=39 // pred_region
          %p310 = scmp.lt.s32.totalorder %s19, 3
          %s311 = scalar_select %p310, %s19, 3
          %s312 = smul.addr %s311, 8
          %s313 = scalar_lea.vmem %s3, %s312
        $region48: #{nsf_forward.7} parent=39 // pred_fallthru
          _
      $region40: #{nsf_forward.7} parent=5 // pred_fallthru
        _
    $region6: #{nsf_forward.7} parent=1 // loop_footer
      %s17 = sadd.s32 1, %s13
    $region7: #{nsf_forward.7} parent=1 // loop_footer_branch
      %12 = sbr.rel target = $region3
    $region8: #{nsf_forward.7} parent=1 // loop_exit
      _
    %314 = vsyncpa [#allocation3], 1
    %s315 = scalar_lea.sflag [#allocation3], 1
    %316 = vsyncpa %s315, 1

// kernel: nsf_forward.8
$region0: #{nsf_forward.8}
  #allocation0 [shape = 'u32[]', space=smem, size = 0x4, offset = 0x4, fixed_abs, tag = 'smem constant byte address 0x4 - core index']
  #allocation1 [shape = 'u32[144,128]{1,0:T(1,128)}', space=vmem, size = 0x12000, scoped, tag = 'internal scratch']
  %s0 = inlined_call_operand.vmem [shape: f32[8,16], index: 0, kind: input, shape index: {}]
  %s1 = inlined_call_operand.vmem [shape: f32[4,8], index: 1, kind: input, shape index: {}]
  %s2 = inlined_call_operand.vmem [shape: f32[32,8], index: 2, kind: input, shape index: {}]
  %s3 = inlined_call_operand.vmem [shape: f32[4,16], index: 3, kind: output, shape index: {0}]
  %s4 = inlined_call_operand.vmem [shape: f32[4,16], index: 4, kind: output, shape index: {1}]
  %5 = xla_tuple %s3, %s4
  %s6 = sld [smem:[#allocation0]]
  $region30: #{nsf_forward.8} parent=0
    _
  %s8 = ssub.s32 1, %s6
  %s9 = scalar_select 0, %s8, %s6
  // Predicated region
  $region2: #{nsf_forward.8} parent=0 // pred_check
    _
  $region3: #{nsf_forward.8} parent=0 // pred_check_branch
    %11 = sbr.rel (0) target = $region5
  $region4: #{nsf_forward.8} parent=0 // pred_region
    _
  $region5: #{nsf_forward.8} parent=0 // pred_fallthru
    _
  // Predicated region
  $region6: #{nsf_forward.8} parent=0 // pred_check
    _
  $region7: #{nsf_forward.8} parent=0 // pred_check_branch
    %13 = sbr.rel (0) target = $region9
  $region8: #{nsf_forward.8} parent=0 // pred_region
    _
  $region9: #{nsf_forward.8} parent=0 // pred_fallthru
    _
  // Predicated region
  $region10: #{nsf_forward.8} parent=0 // pred_check
    _
  $region11: #{nsf_forward.8} parent=0 // pred_check_branch
    %15 = sbr.rel (0) target = $region13
  $region12: #{nsf_forward.8} parent=0 // pred_region
    _
  $region13: #{nsf_forward.8} parent=0 // pred_fallthru
    _
  %v16 = vld [vmem:[%s0] sm:$0xff]
  %v17 = vld [vmem:[%s1] sm:$0xf]
  %vm18 = vcmask 64512
  %v20 = vsel %vm18, %v17, 0
  %22 = vmatprep.subr.mxu0 0.0
  %23 = vmatpush1.msra.mxu0 0.0
  %24 = vmatprep.subr.mxu0 0.0
  %25 = vmatpush1.msra.mxu0 0.0
  %26 = vmatprep.subr.mxu0 0.0
  %27 = vmatpush1.msra.mxu0 0.0
  %28 = vmatprep.subr.mxu0 0.0
  %29 = vmatpush1.msra.mxu0 0.0
  %30 = vmatprep.subr.mxu0 0.0
  %31 = vmatpush1.msra.mxu0 0.0
  %32 = vmatprep.subr.mxu0 0.0
  %33 = vmatpush1.msra.mxu0 0.0
  %34 = vmatprep.subr.mxu0 0.0
  %35 = vmatpush1.msra.mxu0 0.0
  %36 = vmatprep.subr.mxu0 0.0
  %37 = vmatpush1.msra.mxu0 0.0
  %38 = vmatprep.subr.mxu0 0.0
  %39 = vmatpush1.msra.mxu0 0.0
  %40 = vmatprep.subr.mxu0 0.0
  %41 = vmatpush1.msra.mxu0 0.0
  %42 = vmatprep.subr.mxu0 0.0
  %43 = vmatpush1.msra.mxu0 0.0
  %44 = vmatprep.subr.mxu0 0.0
  %45 = vmatpush1.msra.mxu0 0.0
  %46 = vmatprep.subr.mxu0 0.0
  %47 = vmatpush1.msra.mxu0 0.0
  %48 = vmatprep.subr.mxu0 0.0
  %49 = vmatpush1.msra.mxu0 0.0
  %50 = vmatprep.subr.mxu0 0.0
  %51 = vmatpush1.msra.mxu0 0.0
  %52 = vmatprep.subr.mxu0 0.0
  %53 = vmatpush1.msra.mxu0 %v16
  %54 = vmatprep.subr.mxu0 0.0
  %55 = vmatpush2.msra.mxu0 0.0
  %56 = vmatprep.subr.mxu0 0.0
  %57 = vmatpush2.msra.mxu0 0.0
  %58 = vmatprep.subr.mxu0 0.0
  %59 = vmatpush2.msra.mxu0 0.0
  %60 = vmatprep.subr.mxu0 0.0
  %61 = vmatpush2.msra.mxu0 0.0
  %62 = vmatprep.subr.mxu0 0.0
  %63 = vmatpush2.msra.mxu0 0.0
  %64 = vmatprep.subr.mxu0 0.0
  %65 = vmatpush2.msra.mxu0 0.0
  %66 = vmatprep.subr.mxu0 0.0
  %67 = vmatpush2.msra.mxu0 0.0
  %68 = vmatprep.subr.mxu0 0.0
  %69 = vmatpush2.msra.mxu0 0.0
  %70 = vmatprep.subr.mxu0 0.0
  %71 = vmatpush2.msra.mxu0 0.0
  %72 = vmatprep.subr.mxu0 0.0
  %73 = vmatpush2.msra.mxu0 0.0
  %74 = vmatprep.subr.mxu0 0.0
  %75 = vmatpush2.msra.mxu0 0.0
  %76 = vmatprep.subr.mxu0 0.0
  %77 = vmatpush2.msra.mxu0 0.0
  %78 = vmatprep.subr.mxu0 0.0
  %79 = vmatpush2.msra.mxu0 0.0
  %80 = vmatprep.subr.mxu0 0.0
  %81 = vmatpush2.msra.mxu0 0.0
  %82 = vmatprep.subr.mxu0 0.0
  %83 = vmatpush2.msra.mxu0 0.0
  %84 = vmatprep.subr.mxu0 0.0
  %85 = vmatpush2.msra.mxu0 0.0
  %86 = vmatprep.mubr.f32.mxu0 0.0
  %87 = vmatmul.mubr.f32.gmra.mxu0 %v20
  %v88 = vpop.f32.mrf.mxu0
  %v89 = vadd.f32 0.0, %v88
  %v90 = vpop.f32.mrf.mxu0
  %91 = vdwg.mxu0
  %vm92 = vcmask 125952
  %93 = vst.msk [vmem:[%s3] sm:$0xf] %vm92, %v89
  %v94 = vld [vmem:[%s2] sm:$0xff]
  %v95 = vld [vmem:[%s2 + $0x8] sm:$0xff]
  %v96 = vld [vmem:[%s2 + $0x10] sm:$0xff]
  %v97 = vld [vmem:[%s2 + $0x18] sm:$0xff]
  %v99 = vsel %vm18, %v94, 0
  %v102 = vsel %vm18, %v95, 0
  %v105 = vsel %vm18, %v96, 0
  %v108 = vsel %vm18, %v97, 0
  %110 = vmatprep.subr.mxu0 0.0
  %111 = vmatpush1.msra.mxu0 0.0
  %112 = vmatprep.subr.mxu0 0.0
  %113 = vmatpush1.msra.mxu0 0.0
  %114 = vmatprep.subr.mxu0 0.0
  %115 = vmatpush1.msra.mxu0 0.0
  %116 = vmatprep.subr.mxu0 0.0
  %117 = vmatpush1.msra.mxu0 0.0
  %118 = vmatprep.subr.mxu0 0.0
  %119 = vmatpush1.msra.mxu0 0.0
  %120 = vmatprep.subr.mxu0 0.0
  %121 = vmatpush1.msra.mxu0 0.0
  %122 = vmatprep.subr.mxu0 0.0
  %123 = vmatpush1.msra.mxu0 0.0
  %124 = vmatprep.subr.mxu0 0.0
  %125 = vmatpush1.msra.mxu0 0.0
  %126 = vmatprep.subr.mxu0 0.0
  %127 = vmatpush1.msra.mxu0 0.0
  %128 = vmatprep.subr.mxu0 0.0
  %129 = vmatpush1.msra.mxu0 0.0
  %130 = vmatprep.subr.mxu0 0.0
  %131 = vmatpush1.msra.mxu0 0.0
  %132 = vmatprep.subr.mxu0 0.0
  %133 = vmatpush1.msra.mxu0 0.0
  %134 = vmatprep.subr.mxu0 0.0
  %135 = vmatpush1.msra.mxu0 0.0
  %136 = vmatprep.subr.mxu0 0.0
  %137 = vmatpush1.msra.mxu0 0.0
  %138 = vmatprep.subr.mxu0 0.0
  %139 = vmatpush1.msra.mxu0 0.0
  %140 = vmatprep.subr.mxu0 0.0
  %141 = vmatpush1.msra.mxu0 %v16
  %142 = vmatprep.subr.mxu0 0.0
  %143 = vmatpush2.msra.mxu0 0.0
  %144 = vmatprep.subr.mxu0 0.0
  %145 = vmatpush2.msra.mxu0 0.0
  %146 = vmatprep.subr.mxu0 0.0
  %147 = vmatpush2.msra.mxu0 0.0
  %148 = vmatprep.subr.mxu0 0.0
  %149 = vmatpush2.msra.mxu0 0.0
  %150 = vmatprep.subr.mxu0 0.0
  %151 = vmatpush2.msra.mxu0 0.0
  %152 = vmatprep.subr.mxu0 0.0
  %153 = vmatpush2.msra.mxu0 0.0
  %154 = vmatprep.subr.mxu0 0.0
  %155 = vmatpush2.msra.mxu0 0.0
  %156 = vmatprep.subr.mxu0 0.0
  %157 = vmatpush2.msra.mxu0 0.0
  %158 = vmatprep.subr.mxu0 0.0
  %159 = vmatpush2.msra.mxu0 0.0
  %160 = vmatprep.subr.mxu0 0.0
  %161 = vmatpush2.msra.mxu0 0.0
  %162 = vmatprep.subr.mxu0 0.0
  %163 = vmatpush2.msra.mxu0 0.0
  %164 = vmatprep.subr.mxu0 0.0
  %165 = vmatpush2.msra.mxu0 0.0
  %166 = vmatprep.subr.mxu0 0.0
  %167 = vmatpush2.msra.mxu0 0.0
  %168 = vmatprep.subr.mxu0 0.0
  %169 = vmatpush2.msra.mxu0 0.0
  %170 = vmatprep.subr.mxu0 0.0
  %171 = vmatpush2.msra.mxu0 0.0
  %172 = vmatprep.subr.mxu0 0.0
  %173 = vmatpush2.msra.mxu0 0.0
  %174 = vmatprep.mubr.f32.mxu0 0.0
  %175 = vmatmul.mubr.f32.gmra.mxu0 %v99
  %v176 = vpop.f32.mrf.mxu0
  %v177 = vadd.f32 0.0, %v176
  %v178 = vpop.f32.mrf.mxu0
  %179 = vmatprep.mubr.f32.mxu0 0.0
  %180 = vmatmul.mubr.f32.gmra.mxu0 %v102
  %v181 = vpop.f32.mrf.mxu0
  %v182 = vadd.f32 0.0, %v181
  %v183 = vpop.f32.mrf.mxu0
  %184 = vmatprep.mubr.f32.mxu0 0.0
  %185 = vmatmul.mubr.f32.gmra.mxu0 %v105
  %v186 = vpop.f32.mrf.mxu0
  %v187 = vadd.f32 0.0, %v186
  %v188 = vpop.f32.mrf.mxu0
  %189 = vmatprep.mubr.f32.mxu0 0.0
  %190 = vmatmul.mubr.f32.gmra.mxu0 %v108
  %v191 = vpop.f32.mrf.mxu0
  %v192 = vadd.f32 0.0, %v191
  %v193 = vpop.f32.mrf.mxu0
  %194 = vdwg.mxu0
  %v195 = vmul.f32 %v16, %v177
  %vm196 = vcmask 130048
  %v197 = vsel %vm196, %v195, 0.0
  %v198 = vrot.slane %v197, 4
  %v199 = vadd.f32 %v197, %v198
  %v200 = vrot.slane %v199, 2
  %v201 = vadd.f32 %v199, %v200
  %v202 = vrot.slane %v201, 1
  %v203 = vadd.f32 %v201, %v202
  %v204 = vadd.f32 %v203, 1.0
  %v205 = vmul.f32 %v16, %v182
  %v206 = vsel %vm196, %v205, 0.0
  %v207 = vrot.slane %v206, 4
  %v208 = vadd.f32 %v206, %v207
  %v209 = vrot.slane %v208, 2
  %v210 = vadd.f32 %v208, %v209
  %v211 = vrot.slane %v210, 1
  %v212 = vadd.f32 %v210, %v211
  %v213 = vadd.f32 %v212, 1.0
  %v214 = vmul.f32 %v16, %v187
  %v215 = vsel %vm196, %v214, 0.0
  %v216 = vrot.slane %v215, 4
  %v217 = vadd.f32 %v215, %v216
  %v218 = vrot.slane %v217, 2
  %v219 = vadd.f32 %v217, %v218
  %v220 = vrot.slane %v219, 1
  %v221 = vadd.f32 %v219, %v220
  %v222 = vadd.f32 %v221, 1.0
  %v223 = vmul.f32 %v16, %v192
  %v224 = vsel %vm196, %v223, 0.0
  %v225 = vrot.slane %v224, 4
  %v226 = vadd.f32 %v224, %v225
  %v227 = vrot.slane %v226, 2
  %v228 = vadd.f32 %v226, %v227
  %v229 = vrot.slane %v228, 1
  %v230 = vadd.f32 %v228, %v229
  %v231 = vadd.f32 %v230, 1.0
  %vm232 = vcmask 1040384
  %v233 = vsel %vm232, %v204, %v213
  %vm234 = vcmask 1041408
  %v235 = vsel %vm234, %v233, %v222
  %vm236 = vcmask 1042432
  %v237 = vsel %vm236, %v235, %v231
  %v238 = vmax.f32 %v237, 1e-12
  %v239 = vrsqrt.pop %v238
  %v240 = vmul.f32 %v238, %v239
  %vm241 = vcmp.eq.f32.partialorder %v238, inf
  %v242 = vsel %vm241, %v238, %v240
  %vm243 = vcmp.eq.f32.partialorder %v238, 0.0
  %v244 = vand.u32 %v238, 2147483648
  %v245 = vsel %vm243, %v244, %v242
  %246 = vst.msk [vmem:[%s4] sm:$0xf] %vm92, %v245
  // Predicated region
  $region14: #{nsf_forward.8} parent=0 // pred_check
    _
  $region15: #{nsf_forward.8} parent=0 // pred_check_branch
    %248 = sbr.rel (0) target = $region17
  $region16: #{nsf_forward.8} parent=0 // pred_region
    _
  $region17: #{nsf_forward.8} parent=0 // pred_fallthru
    _
  // Predicated region
  $region18: #{nsf_forward.8} parent=0 // pred_check
    _
  $region19: #{nsf_forward.8} parent=0 // pred_check_branch
    %250 = sbr.rel (0) target = $region21
  $region20: #{nsf_forward.8} parent=0 // pred_region
    _
  $region21: #{nsf_forward.8} parent=0 // pred_fallthru
    _
  // Predicated region
  $region22: #{nsf_forward.8} parent=0 // pred_check
    _
  $region23: #{nsf_forward.8} parent=0 // pred_check_branch
    %252 = sbr.rel (0) target = $region25
  $region24: #{nsf_forward.8} parent=0 // pred_region
    _
  $region25: #{nsf_forward.8} parent=0 // pred_fallthru
    _
  // Predicated region
  $region26: #{nsf_forward.8} parent=0 // pred_check
    _
  $region27: #{nsf_forward.8} parent=0 // pred_check_branch
    %254 = sbr.rel (0) target = $region29
  $region28: #{nsf_forward.8} parent=0 // pred_region
    _
  $region29: #{nsf_forward.8} parent=0 // pred_fallthru
    _

// kernel: nsf_forward.9
$region0: #{nsf_forward.9}
  #allocation0 [shape = 'u32[]', space=smem, size = 0x4, offset = 0x4, fixed_abs, tag = 'smem constant byte address 0x4 - core index']
  #allocation1 [shape = 'u32[144,128]{1,0:T(1,128)}', space=vmem, size = 0x12000, scoped, tag = 'internal scratch']
  #allocation2 [shape = 'f32[3,4,16]{2,1,0:T(4,128)}', space=vmem, size = 0x1800, scoped, tag = 'scratch operand']
  %s0 = inlined_call_operand.vmem [shape: f32[4,16], index: 0, kind: input, shape index: {}]
  %s1 = inlined_call_operand.vmem [shape: f32[4,16], index: 1, kind: input, shape index: {}]
  %s2 = inlined_call_operand.vmem [shape: f32[3,4,16], index: 2, kind: input, shape index: {}]
  %s3 = inlined_call_operand.vmem [shape: f32[6,4], index: 3, kind: input, shape index: {}]
  %s4 = inlined_call_operand.vmem [shape: f32[1,16], index: 4, kind: input, shape index: {}]
  %s5 = inlined_call_operand.hbm [shape: f32[3,6,16], index: 5, kind: output, shape index: {}]
  %s6 = sld [smem:[#allocation0]]
  $region34: #{nsf_forward.9} parent=0
    _
  %s8 = ssub.s32 1, %s6
  %s9 = scalar_select 0, %s8, %s6
  $region1: #{nsf_forward.9} parent=0
    #allocation3 [shape = 'u8[12288]{0}', space=vmem, size = 0x3000, scoped, tag = 'output window, operand 0, single buffered']
    #allocation4 [shape = 's32[1]{0}', space=sflag, size = 0x4, scoped, tag = 'scoped memory for nsf_forward.9']
    %10 = vsyncpa [#allocation4], 0
    // Predicated region
    $region2: #{nsf_forward.9} parent=1 // pred_check
      _
    $region3: #{nsf_forward.9} parent=1 // pred_check_branch
      %12 = sbr.rel (0) target = $region5
    $region4: #{nsf_forward.9} parent=1 // pred_region
      _
    $region5: #{nsf_forward.9} parent=1 // pred_fallthru
      _
    // Predicated region
    $region6: #{nsf_forward.9} parent=1 // pred_check
      _
    $region7: #{nsf_forward.9} parent=1 // pred_check_branch
      %14 = sbr.rel (0) target = $region9
    $region8: #{nsf_forward.9} parent=1 // pred_region
      _
    $region9: #{nsf_forward.9} parent=1 // pred_fallthru
      _
    // Predicated region
    $region10: #{nsf_forward.9} parent=1 // pred_check
      _
    $region11: #{nsf_forward.9} parent=1 // pred_check_branch
      %16 = sbr.rel (0) target = $region13
    $region12: #{nsf_forward.9} parent=1 // pred_region
      _
    $region13: #{nsf_forward.9} parent=1 // pred_fallthru
      _
    // Predicated region
    $region14: #{nsf_forward.9} parent=1 // pred_check
      _
    $region15: #{nsf_forward.9} parent=1 // pred_check_branch
      %18 = sbr.rel (0) target = $region17
    $region16: #{nsf_forward.9} parent=1 // pred_region
      _
    $region17: #{nsf_forward.9} parent=1 // pred_fallthru
      _
    // Predicated region
    $region18: #{nsf_forward.9} parent=1 // pred_check
      _
    $region19: #{nsf_forward.9} parent=1 // pred_check_branch
      %20 = sbr.rel (0) target = $region21
    $region20: #{nsf_forward.9} parent=1 // pred_region
      _
    $region21: #{nsf_forward.9} parent=1 // pred_fallthru
      _
    %p21 = scmp.eq.s32.totalorder 0, 0
    // Predicated region
    $region22: #{nsf_forward.9} parent=1 // pred_check
      %p22 = pneg %p21
    $region23: #{nsf_forward.9} parent=1 // pred_check_branch
      %24 = sbr.rel (%p22) target = $region25
    $region24: #{nsf_forward.9} parent=1 // pred_region
      %v25 = vld [vmem:[%s4] sm:$0x1]
      %v26 = vld [vmem:[%s0] sm:$0xf]
      %v27 = vld [vmem:[%s1] sm:$0xf]
      %v28 = vld [vmem:[%s2] sm:$0xf]
      %v29 = vld [vmem:[%s2 + $0x4] sm:$0xf]
      %v30 = vld [vmem:[%s2 + $0x8] sm:$0xf]
      %v31 = vmul.f32 %v27, %v28
      %v32 = vmul.f32 %v27, %v29
      %v33 = vmul.f32 %v27, %v30
      %v34 = vadd.f32 %v26, %v31
      %v35 = vadd.f32 %v26, %v32
      %v36 = vadd.f32 %v26, %v33
      %v37 = vmul.f32 %v34, 1.442695
      %v38 = vpow.pop %v37
      %v39 = vmul.f32 %v35, 1.442695
      %v40 = vpow.pop %v39
      %v41 = vmul.f32 %v36, 1.442695
      %v42 = vpow.pop %v41
      %v44 = vlaneseq
      %v45 = vshrl.u32 %v44, 7
      %v46 = vsub.s32 0, %v45
      %v47 = vrot.slane %v25, %v46
      %v49 = vmul.f32 %v47, %v38
      %v50 = vmul.f32 %v47, %v40
      %v51 = vmul.f32 %v47, %v42
      %vm52 = vcmask 125952
      %53 = vst.msk [vmem:[#allocation2] sm:$0xf] %vm52, %v49
      %54 = vst.msk [vmem:[#allocation2 + $0x4] sm:$0xf] %vm52, %v50
      %55 = vst.msk [vmem:[#allocation2 + $0x8] sm:$0xf] %vm52, %v51
    $region25: #{nsf_forward.9} parent=1 // pred_fallthru
      _
    %v56 = vld [vmem:[%s3] sm:$0x3f]
    %v57 = vld [vmem:[#allocation2] sm:$0xf]
    %vm58 = vcmask 31744
    %v60 = vsel %vm58, %v56, 0
    %vm62 = vcmask 1043456
    %v64 = vsel %vm62, %v57, 0
    %66 = vmatprep.subr.mxu0 0.0
    %67 = vmatpush1.msra.mxu0 0.0
    %68 = vmatprep.subr.mxu0 0.0
    %69 = vmatpush1.msra.mxu0 0.0
    %70 = vmatprep.subr.mxu0 0.0
    %71 = vmatpush1.msra.mxu0 0.0
    %72 = vmatprep.subr.mxu0 0.0
    %73 = vmatpush1.msra.mxu0 0.0
    %74 = vmatprep.subr.mxu0 0.0
    %75 = vmatpush1.msra.mxu0 0.0
    %76 = vmatprep.subr.mxu0 0.0
    %77 = vmatpush1.msra.mxu0 0.0
    %78 = vmatprep.subr.mxu0 0.0
    %79 = vmatpush1.msra.mxu0 0.0
    %80 = vmatprep.subr.mxu0 0.0
    %81 = vmatpush1.msra.mxu0 0.0
    %82 = vmatprep.subr.mxu0 0.0
    %83 = vmatpush1.msra.mxu0 0.0
    %84 = vmatprep.subr.mxu0 0.0
    %85 = vmatpush1.msra.mxu0 0.0
    %86 = vmatprep.subr.mxu0 0.0
    %87 = vmatpush1.msra.mxu0 0.0
    %88 = vmatprep.subr.mxu0 0.0
    %89 = vmatpush1.msra.mxu0 0.0
    %90 = vmatprep.subr.mxu0 0.0
    %91 = vmatpush1.msra.mxu0 0.0
    %92 = vmatprep.subr.mxu0 0.0
    %93 = vmatpush1.msra.mxu0 0.0
    %94 = vmatprep.subr.mxu0 0.0
    %95 = vmatpush1.msra.mxu0 0.0
    %96 = vmatprep.subr.mxu0 0.0
    %97 = vmatpush1.msra.mxu0 %v64
    %98 = vmatprep.subr.mxu0 0.0
    %99 = vmatpush2.msra.mxu0 0.0
    %100 = vmatprep.subr.mxu0 0.0
    %101 = vmatpush2.msra.mxu0 0.0
    %102 = vmatprep.subr.mxu0 0.0
    %103 = vmatpush2.msra.mxu0 0.0
    %104 = vmatprep.subr.mxu0 0.0
    %105 = vmatpush2.msra.mxu0 0.0
    %106 = vmatprep.subr.mxu0 0.0
    %107 = vmatpush2.msra.mxu0 0.0
    %108 = vmatprep.subr.mxu0 0.0
    %109 = vmatpush2.msra.mxu0 0.0
    %110 = vmatprep.subr.mxu0 0.0
    %111 = vmatpush2.msra.mxu0 0.0
    %112 = vmatprep.subr.mxu0 0.0
    %113 = vmatpush2.msra.mxu0 0.0
    %114 = vmatprep.subr.mxu0 0.0
    %115 = vmatpush2.msra.mxu0 0.0
    %116 = vmatprep.subr.mxu0 0.0
    %117 = vmatpush2.msra.mxu0 0.0
    %118 = vmatprep.subr.mxu0 0.0
    %119 = vmatpush2.msra.mxu0 0.0
    %120 = vmatprep.subr.mxu0 0.0
    %121 = vmatpush2.msra.mxu0 0.0
    %122 = vmatprep.subr.mxu0 0.0
    %123 = vmatpush2.msra.mxu0 0.0
    %124 = vmatprep.subr.mxu0 0.0
    %125 = vmatpush2.msra.mxu0 0.0
    %126 = vmatprep.subr.mxu0 0.0
    %127 = vmatpush2.msra.mxu0 0.0
    %128 = vmatprep.subr.mxu0 0.0
    %129 = vmatpush2.msra.mxu0 0.0
    %130 = vmatprep.mubr.f32.mxu0 0.0
    %131 = vmatmul.mubr.f32.gmra.mxu0 %v60
    %v132 = vpop.f32.mrf.mxu0
    %v133 = vadd.f32 0.0, %v132
    %v134 = vpop.f32.mrf.mxu0
    %135 = vdwg.mxu0
    %vm136 = vcmask 128000
    %137 = vst.msk [vmem:[#allocation3] sm:$0x3f] %vm136, %v133
    %s138 = scalar_lea.vmem [#allocation2], 4
    %v139 = vld [vmem:[%s138] sm:$0xf]
    %v141 = vsel %vm62, %v139, 0
    %143 = vmatprep.subr.mxu0 0.0
    %144 = vmatpush1.msra.mxu0 0.0
    %145 = vmatprep.subr.mxu0 0.0
    %146 = vmatpush1.msra.mxu0 0.0
    %147 = vmatprep.subr.mxu0 0.0
    %148 = vmatpush1.msra.mxu0 0.0
    %149 = vmatprep.subr.mxu0 0.0
    %150 = vmatpush1.msra.mxu0 0.0
    %151 = vmatprep.subr.mxu0 0.0
    %152 = vmatpush1.msra.mxu0 0.0
    %153 = vmatprep.subr.mxu0 0.0
    %154 = vmatpush1.msra.mxu0 0.0
    %155 = vmatprep.subr.mxu0 0.0
    %156 = vmatpush1.msra.mxu0 0.0
    %157 = vmatprep.subr.mxu0 0.0
    %158 = vmatpush1.msra.mxu0 0.0
    %159 = vmatprep.subr.mxu0 0.0
    %160 = vmatpush1.msra.mxu0 0.0
    %161 = vmatprep.subr.mxu0 0.0
    %162 = vmatpush1.msra.mxu0 0.0
    %163 = vmatprep.subr.mxu0 0.0
    %164 = vmatpush1.msra.mxu0 0.0
    %165 = vmatprep.subr.mxu0 0.0
    %166 = vmatpush1.msra.mxu0 0.0
    %167 = vmatprep.subr.mxu0 0.0
    %168 = vmatpush1.msra.mxu0 0.0
    %169 = vmatprep.subr.mxu0 0.0
    %170 = vmatpush1.msra.mxu0 0.0
    %171 = vmatprep.subr.mxu0 0.0
    %172 = vmatpush1.msra.mxu0 0.0
    %173 = vmatprep.subr.mxu0 0.0
    %174 = vmatpush1.msra.mxu0 %v141
    %175 = vmatprep.subr.mxu0 0.0
    %176 = vmatpush2.msra.mxu0 0.0
    %177 = vmatprep.subr.mxu0 0.0
    %178 = vmatpush2.msra.mxu0 0.0
    %179 = vmatprep.subr.mxu0 0.0
    %180 = vmatpush2.msra.mxu0 0.0
    %181 = vmatprep.subr.mxu0 0.0
    %182 = vmatpush2.msra.mxu0 0.0
    %183 = vmatprep.subr.mxu0 0.0
    %184 = vmatpush2.msra.mxu0 0.0
    %185 = vmatprep.subr.mxu0 0.0
    %186 = vmatpush2.msra.mxu0 0.0
    %187 = vmatprep.subr.mxu0 0.0
    %188 = vmatpush2.msra.mxu0 0.0
    %189 = vmatprep.subr.mxu0 0.0
    %190 = vmatpush2.msra.mxu0 0.0
    %191 = vmatprep.subr.mxu0 0.0
    %192 = vmatpush2.msra.mxu0 0.0
    %193 = vmatprep.subr.mxu0 0.0
    %194 = vmatpush2.msra.mxu0 0.0
    %195 = vmatprep.subr.mxu0 0.0
    %196 = vmatpush2.msra.mxu0 0.0
    %197 = vmatprep.subr.mxu0 0.0
    %198 = vmatpush2.msra.mxu0 0.0
    %199 = vmatprep.subr.mxu0 0.0
    %200 = vmatpush2.msra.mxu0 0.0
    %201 = vmatprep.subr.mxu0 0.0
    %202 = vmatpush2.msra.mxu0 0.0
    %203 = vmatprep.subr.mxu0 0.0
    %204 = vmatpush2.msra.mxu0 0.0
    %205 = vmatprep.subr.mxu0 0.0
    %206 = vmatpush2.msra.mxu0 0.0
    %207 = vmatprep.mubr.f32.mxu0 0.0
    %208 = vmatmul.mubr.f32.gmra.mxu0 %v60
    %v209 = vpop.f32.mrf.mxu0
    %v210 = vadd.f32 0.0, %v209
    %v211 = vpop.f32.mrf.mxu0
    %212 = vdwg.mxu0
    %s213 = scalar_lea.vmem [#allocation3], 8
    %214 = vst.msk [vmem:[%s213] sm:$0x3f] %vm136, %v210
    %s215 = scalar_lea.vmem [#allocation2], 8
    %v216 = vld [vmem:[%s215] sm:$0xf]
    %v218 = vsel %vm62, %v216, 0
    %220 = vmatprep.subr.mxu0 0.0
    %221 = vmatpush1.msra.mxu0 0.0
    %222 = vmatprep.subr.mxu0 0.0
    %223 = vmatpush1.msra.mxu0 0.0
    %224 = vmatprep.subr.mxu0 0.0
    %225 = vmatpush1.msra.mxu0 0.0
    %226 = vmatprep.subr.mxu0 0.0
    %227 = vmatpush1.msra.mxu0 0.0
    %228 = vmatprep.subr.mxu0 0.0
    %229 = vmatpush1.msra.mxu0 0.0
    %230 = vmatprep.subr.mxu0 0.0
    %231 = vmatpush1.msra.mxu0 0.0
    %232 = vmatprep.subr.mxu0 0.0
    %233 = vmatpush1.msra.mxu0 0.0
    %234 = vmatprep.subr.mxu0 0.0
    %235 = vmatpush1.msra.mxu0 0.0
    %236 = vmatprep.subr.mxu0 0.0
    %237 = vmatpush1.msra.mxu0 0.0
    %238 = vmatprep.subr.mxu0 0.0
    %239 = vmatpush1.msra.mxu0 0.0
    %240 = vmatprep.subr.mxu0 0.0
    %241 = vmatpush1.msra.mxu0 0.0
    %242 = vmatprep.subr.mxu0 0.0
    %243 = vmatpush1.msra.mxu0 0.0
    %244 = vmatprep.subr.mxu0 0.0
    %245 = vmatpush1.msra.mxu0 0.0
    %246 = vmatprep.subr.mxu0 0.0
    %247 = vmatpush1.msra.mxu0 0.0
    %248 = vmatprep.subr.mxu0 0.0
    %249 = vmatpush1.msra.mxu0 0.0
    %250 = vmatprep.subr.mxu0 0.0
    %251 = vmatpush1.msra.mxu0 %v218
    %252 = vmatprep.subr.mxu0 0.0
    %253 = vmatpush2.msra.mxu0 0.0
    %254 = vmatprep.subr.mxu0 0.0
    %255 = vmatpush2.msra.mxu0 0.0
    %256 = vmatprep.subr.mxu0 0.0
    %257 = vmatpush2.msra.mxu0 0.0
    %258 = vmatprep.subr.mxu0 0.0
    %259 = vmatpush2.msra.mxu0 0.0
    %260 = vmatprep.subr.mxu0 0.0
    %261 = vmatpush2.msra.mxu0 0.0
    %262 = vmatprep.subr.mxu0 0.0
    %263 = vmatpush2.msra.mxu0 0.0
    %264 = vmatprep.subr.mxu0 0.0
    %265 = vmatpush2.msra.mxu0 0.0
    %266 = vmatprep.subr.mxu0 0.0
    %267 = vmatpush2.msra.mxu0 0.0
    %268 = vmatprep.subr.mxu0 0.0
    %269 = vmatpush2.msra.mxu0 0.0
    %270 = vmatprep.subr.mxu0 0.0
    %271 = vmatpush2.msra.mxu0 0.0
    %272 = vmatprep.subr.mxu0 0.0
    %273 = vmatpush2.msra.mxu0 0.0
    %274 = vmatprep.subr.mxu0 0.0
    %275 = vmatpush2.msra.mxu0 0.0
    %276 = vmatprep.subr.mxu0 0.0
    %277 = vmatpush2.msra.mxu0 0.0
    %278 = vmatprep.subr.mxu0 0.0
    %279 = vmatpush2.msra.mxu0 0.0
    %280 = vmatprep.subr.mxu0 0.0
    %281 = vmatpush2.msra.mxu0 0.0
    %282 = vmatprep.subr.mxu0 0.0
    %283 = vmatpush2.msra.mxu0 0.0
    %284 = vmatprep.mubr.f32.mxu0 0.0
    %285 = vmatmul.mubr.f32.gmra.mxu0 %v60
    %v286 = vpop.f32.mrf.mxu0
    %v287 = vadd.f32 0.0, %v286
    %v288 = vpop.f32.mrf.mxu0
    %289 = vdwg.mxu0
    %s290 = scalar_lea.vmem [#allocation3], 16
    %291 = vst.msk [vmem:[%s290] sm:$0x3f] %vm136, %v287
    // Predicated region
    $region26: #{nsf_forward.9} parent=1 // pred_check
      _
    $region27: #{nsf_forward.9} parent=1 // pred_check_branch
      %293 = sbr.rel (0) target = $region29
    $region28: #{nsf_forward.9} parent=1 // pred_region
      %s295 = ssub.s32 384, 384
      %296 = vsyncadd [#allocation4], %s295
      %s297 = sshll.u32 [#allocation3], 4
      %s298 = int_to_ptr.vmem [resolvable:$true] %s297
      %303 = dma.vmem_to_hbm [thread:$0]  %s298, 384, %s5, [#allocation4], 128, 128, 8
    $region29: #{nsf_forward.9} parent=1 // pred_fallthru
      _
    // Predicated region
    $region30: #{nsf_forward.9} parent=1 // pred_check
      _
    $region31: #{nsf_forward.9} parent=1 // pred_check_branch
      %305 = sbr.rel (0) target = $region33
    $region32: #{nsf_forward.9} parent=1 // pred_region
      %306 = dma.done [#allocation4], 384
    $region33: #{nsf_forward.9} parent=1 // pred_fallthru
      _
    %307 = vsyncpa [#allocation4], 1

</llo_original>
